<compile_context>
chip_gen: v7x
topology: tpu7x:2x2x1
jax: 0.10.0
libtpu: 0.0.40
codegen_flags: <defaults>
</compile_context>

<pallas_src>
import jax
import jax.numpy as jnp
from jax import lax
from jax.experimental import pallas as pl
from jax.experimental.pallas import tpu as pltpu


# --------------------------------------------------------------------------
# Host-side weight packing: everything into one weight slab + one bias slab.
# All weights are stored transposed as (C_out, taps*C_in) column blocks.
# --------------------------------------------------------------------------
def _pack_weights(W, *, in_S, out_S, K_S, channels, k_T, n_out):
    n_feat = in_S + 2
    tcn_in = out_S + 2

    # Fuse SpatialConv + implicit_net (distance & time_gap share the same
    # Conv1d(1,1,K_S)) into one front-end weight of shape (K_S*n_feat, tcn_in).
    wf = jnp.zeros((K_S * n_feat, tcn_in), jnp.float32)
    for j in range(K_S):
        wf = wf.at[j * n_feat:j * n_feat + in_S, :out_S].set(
            W['sc_w'][j * in_S:(j + 1) * in_S, :])
        wf = wf.at[j * n_feat + in_S, out_S].set(W['imp_w'][j])
        wf = wf.at[j * n_feat + in_S + 1, out_S + 1].set(W['imp_w'][j])
    bf = jnp.concatenate([W['sc_b'][0], W['imp_b'], W['imp_b']])   # (tcn_in,)

    wmats = [('front', wf.T)]                       # (tcn_in, K_S*n_feat)
    bvecs = [('front', bf)]
    for i, _c in enumerate(channels):
        blk = W['blocks'][i]
        wmats += [(f'c1_{i}', blk['c1_w'].T),       # (C, k_T*C_prev)
                  (f'c2_{i}', blk['c2_w'].T),       # (C, k_T*C)
                  (f'ds_{i}', blk['ds_w'].T)]       # (C, C_prev)
        bvecs += [(f'c1_{i}', blk['c1_b'][0]),
                  (f'c2_{i}', blk['c2_b'][0]),
                  (f'ds_{i}', blk['ds_b'][0])]
    wmats.append(('fc', W['fc_w'].T))               # (n_out, C_last)
    bvecs.append(('fc', W['fc_b'][0]))

    r_max = max(m.shape[0] for _, m in wmats)
    r_max = ((r_max + 7) // 8) * 8
    wcols = sum(m.shape[1] for _, m in wmats)
    wcols = ((wcols + 127) // 128) * 128
    bcols = ((len(bvecs) + 127) // 128) * 128

    w_slab = jnp.zeros((r_max, wcols), jnp.float32)
    wmeta = {}
    off = 0
    for key, m in wmats:
        wmeta[key] = (off, m.shape[0], m.shape[1])
        w_slab = w_slab.at[:m.shape[0], off:off + m.shape[1]].set(m)
        off += m.shape[1]

    b_slab = jnp.zeros((r_max, bcols), jnp.float32)
    bmeta = {}
    for j, (key, v) in enumerate(bvecs):
        bmeta[key] = (j, v.shape[0])
        b_slab = b_slab.at[:v.shape[0], j].set(v)

    return w_slab, b_slab, wmeta, bmeta


# --------------------------------------------------------------------------
# Kernel factory.
# --------------------------------------------------------------------------
def make_deep_ptp_kernel(L, B_TILE, n_feat, out_S, K_S, channels, k_T, n_out,
                         wmeta, bmeta):
    tcn_in = out_S + 2
    L_out = L - K_S + 1
    N = L * B_TILE                       # lane-flattened (time, batch) axis

    def kernel(x_ref, w_ref, b_ref, out_ref):
        x = x_ref[0]                     # (n_feat, N), channels on sublanes
        w_all = w_ref[...]               # one pre-packed weight slab
        b_all = b_ref[...]               # one pre-packed bias slab

        def w_block(key, tap=None, tap_width=None):
            off, rows, width = wmeta[key]
            if tap is None:
                return w_all[:rows, off:off + width]
            return w_all[:rows, off + tap * tap_width:off + (tap + 1) * tap_width]

        def bias(key):
            col, rows = bmeta[key]
            return b_all[:rows, col:col + 1]          # (rows, 1) broadcasts over N

        # Time shifts are pure lane shifts (time-major flattening) -> the zero
        # fill lands exactly on the causal / valid-conv boundary; no masks.
        def shift_back(v, steps):                     # out[t] = v[t - steps]
            if steps == 0:
                return v
            sh = steps * B_TILE
            return jnp.concatenate(
                [jnp.zeros((v.shape[0], sh), jnp.float32), v[:, :N - sh]], axis=1)

        def shift_fwd(v, steps):                      # out[t] = v[t + steps]
            if steps == 0:
                return v
            sh = steps * B_TILE
            return jnp.concatenate(
                [v[:, sh:], jnp.zeros((v.shape[0], sh), jnp.float32)], axis=1)

        # ---- fused SpatialConv + implicit_net front-end ----
        y = jnp.zeros((tcn_in, N), jnp.float32) + bias('front')
        for j in range(K_S):
            y = y + jnp.dot(w_block('front', tap=j, tap_width=n_feat),
                            shift_fwd(x, j),
                            preferred_element_type=jnp.float32)
        # ELU on the spatial rows only; implicit (distance / time) rows stay
        # linear.  exp(min(y,0)) avoids transient inf on large positives.
        is_sp = lax.broadcasted_iota(jnp.int32, (tcn_in, N), 0) < out_S
        h = jnp.where(jnp.logical_and(is_sp, y < 0.0),
                      jnp.exp(jnp.minimum(y, 0.0)) - 1.0, y)

        def causal_conv(v, key, dil, c_in):
            acc = jnp.zeros((wmeta[key][1], N), jnp.float32) + bias(key)
            for t in range(k_T):
                acc = acc + jnp.dot(w_block(key, tap=t, tap_width=c_in),
                                    shift_back(v, (k_T - 1 - t) * dil),
                                    preferred_element_type=jnp.float32)
            return acc

        # ------------------------------ TCN ------------------------------
        c_prev = tcn_in
        for i, c in enumerate(channels):
            dil = 2 ** i
            # Always apply the (possibly identity) residual projection so a
            # checkpoint shipping a real downsample conv is honoured.
            res = jnp.dot(w_block(f'ds_{i}'), h,
                          preferred_element_type=jnp.float32) + bias(f'ds_{i}')
            h1 = jnp.maximum(causal_conv(h, f'c1_{i}', dil, c_prev), 0.0)
            h2 = jnp.maximum(causal_conv(h1, f'c2_{i}', dil, c), 0.0)
            h = jnp.maximum(h2 + res, 0.0)
            c_prev = c

        # ---- last valid timestep: static contiguous lane slice ----
        start = (L_out - 1) * B_TILE
        h_last = h[:, start:start + B_TILE]           # (C_last, B_TILE)

        # ---- full_connect + log_softmax, batch on lanes ----
        logits = jnp.dot(w_block('fc'), h_last,
                         preferred_element_type=jnp.float32) + bias('fc')
        z = logits - jnp.max(logits, axis=0, keepdims=True)
        logp = z - jnp.log(jnp.sum(jnp.exp(z), axis=0, keepdims=True))
        out_ref[...] = logp[None].astype(out_ref.dtype)     # (1, n_out, B_TILE)

    return kernel


# --------------------------------------------------------------------------
# Wrapper.
# --------------------------------------------------------------------------
def deep_ptp_pallas(parameters, W, *, in_S, out_S, K_S, channels, k_T, n_out,
                    b_tile=256):
    assert in_S == 2, "SpatialConv input is the stacked (longitude, latitude)"
    n_feat = in_S + 2
    lng = parameters['longitude'].astype(jnp.float32)
    lat = parameters['latitude'].astype(jnp.float32)
    dist = parameters['distance'].astype(jnp.float32)
    tgap = parameters['time_gap'].astype(jnp.float32)
    B, L = lng.shape

    # Batch tile: big tiles amortize the per-step grid/DMA overhead; the
    # channels-on-sublanes layout keeps VMEM tiny (~C * L*B_TILE * 4 B per
    # live activation) so b_tile up to ~1024 fits every generation's VMEM.
    B_TILE = min(b_tile, ((B + 7) // 8) * 8)
    G = (B + B_TILE - 1) // B_TILE
    B_pad = G * B_TILE
    N = L * B_TILE

    # Pack the four streams as (G, n_feat, L*B_TILE) with lane index
    # t*B_TILE + b -> one wide contiguous DMA slab per grid step.
    x = jnp.stack([lng, lat, dist, tgap], axis=0)              # (n_feat, B, L)
    if B_pad != B:
        x = jnp.concatenate(
            [x, jnp.zeros((n_feat, B_pad - B, L), jnp.float32)], axis=1)
    x = (x.reshape(n_feat, G, B_TILE, L)
          .transpose(1, 0, 3, 2)
          .reshape(G, n_feat, N))

    w_slab, b_slab, wmeta, bmeta = _pack_weights(
        W, in_S=in_S, out_S=out_S, K_S=K_S, channels=channels,
        k_T=k_T, n_out=n_out)

    kernel = make_deep_ptp_kernel(L, B_TILE, n_feat, out_S, K_S, channels,
                                  k_T, n_out, wmeta, bmeta)

    out = pl.pallas_call(
        kernel,
        out_shape=jax.ShapeDtypeStruct((G, n_out, B_TILE), jnp.float32),
        grid=(G,),
        in_specs=[
            pl.BlockSpec((1, n_feat, N), lambda g: (g, 0, 0)),
            pl.BlockSpec(w_slab.shape, lambda g: (0, 0)),
            pl.BlockSpec(b_slab.shape, lambda g: (0, 0)),
        ],
        out_specs=pl.BlockSpec((1, n_out, B_TILE), lambda g: (g, 0, 0)),
        compiler_params=pltpu.CompilerParams(
            dimension_semantics=("parallel",),
            vmem_limit_bytes=32 * 1024 * 1024),
    )(x, w_slab, b_slab)

    # (G, n_out, B_TILE) -> (B, n_out)
    return out.transpose(0, 2, 1).reshape(B_pad, n_out)[:B]


# --------------------------------------------------------------------------
# Pure-JAX reference (mirrors the PyTorch module in eval mode).
# --------------------------------------------------------------------------
def reference_forward(parameters, W, *, in_S, out_S, K_S, channels, k_T, n_out):
    lng = parameters['longitude'].astype(jnp.float32)
    lat = parameters['latitude'].astype(jnp.float32)
    dist = parameters['distance'].astype(jnp.float32)
    tgap = parameters['time_gap'].astype(jnp.float32)
    B, L = lng.shape
    L_out = L - K_S + 1
    x = jnp.stack([lng, lat], axis=-1)

    sp = jnp.zeros((B, L_out, out_S)) + W['sc_b']
    for t in range(K_S):
        sp = sp + jnp.einsum('blc,cd->bld', x[:, t:t + L_out, :],
                             W['sc_w'][t * in_S:(t + 1) * in_S, :])
    sp = jnp.where(sp > 0, sp, jnp.exp(sp) - 1.0)

    def implicit(seq):
        y = jnp.zeros((B, L_out, 1)) + W['imp_b'][0]
        for t in range(K_S):
            y = y + W['imp_w'][t] * seq[:, t:t + L_out, None]
        return y

    h = jnp.concatenate([sp, implicit(dist), implicit(tgap)], axis=-1)
    C_prev = out_S + 2
    for i, C in enumerate(channels):
        blk = W['blocks'][i]
        dil = 2 ** i
        p = (k_T - 1) * dil

        def causal(xx, w, b, C_in, dil=dil, p=p):
            xp = jnp.concatenate([jnp.zeros((B, p, C_in), xx.dtype), xx], axis=1)
            y = jnp.zeros((B, L_out, w.shape[1])) + b
            for t in range(k_T):
                y = y + jnp.einsum('blc,cd->bld',
                                   xp[:, t * dil:t * dil + L_out, :],
                                   w[t * C_in:(t + 1) * C_in, :])
            return y

        res = jnp.einsum('blc,cd->bld', h, blk['ds_w']) + blk['ds_b']
        h1 = jax.nn.relu(causal(h, blk['c1_w'], blk['c1_b'], C_prev))
        h2 = jax.nn.relu(causal(h1, blk['c2_w'], blk['c2_b'], C))
        h = jax.nn.relu(h2 + res)
        C_prev = C

    logits = h[:, -1, :] @ W['fc_w'] + W['fc_b']
    return jax.nn.log_softmax(logits, axis=1)


def init_weights(key, *, in_S, out_S, K_S, channels, k_T, n_out):
    tcn_in = out_S + 2

    def nrm(k, shape, scale):
        return scale * jax.random.normal(k, shape, dtype=jnp.float32)

    keys = iter(jax.random.split(key, 64))
    W = {
        'sc_w': nrm(next(keys), (K_S * in_S, out_S), 0.3),
        'sc_b': nrm(next(keys), (1, out_S), 0.1),
        'imp_w': nrm(next(keys), (K_S,), 0.3),
        'imp_b': nrm(next(keys), (1,), 0.1),
        'fc_w': nrm(next(keys), (channels[-1], n_out), 0.3),
        'fc_b': nrm(next(keys), (1, n_out), 0.1),
        'blocks': [],
    }
    C_prev = tcn_in
    for C in channels:
        blk = {
            'c1_w': nrm(next(keys), (k_T * C_prev, C), 0.3),
            'c1_b': nrm(next(keys), (1, C), 0.1),
            'c2_w': nrm(next(keys), (k_T * C, C), 0.3),
            'c2_b': nrm(next(keys), (1, C), 0.1),
        }
        if C_prev == C:
            # canonical TCN: no downsample conv -> identity residual
            blk['ds_w'] = jnp.eye(C, dtype=jnp.float32)
            blk['ds_b'] = jnp.zeros((1, C), jnp.float32)
        else:
            blk['ds_w'] = nrm(next(keys), (C_prev, C), 0.3)
            blk['ds_b'] = nrm(next(keys), (1, C), 0.1)
        W['blocks'].append(blk)
        C_prev = C
    return W


if __name__ == "__main__":
    B, L = 16, 16
    in_S, out_S, K_S = 2, 4, 3          # SpatialConv config (lng/lat channels)
    channels = [8, 8]                   # num_channels_T
    k_T = 2                             # TCN default kernel size
    n_out = 5                           # num_outputs_T (classes)

    keys = jax.random.split(jax.random.PRNGKey(0), 5)
    parameters = {
        'longitude': jax.random.normal(keys[0], (B, L), jnp.float32),
        'latitude':  jax.random.normal(keys[1], (B, L), jnp.float32),
        'distance':  jax.random.normal(keys[2], (B, L), jnp.float32),
        'time_gap':  jax.random.normal(keys[3], (B, L), jnp.float32),
    }
    W = init_weights(keys[4], in_S=in_S, out_S=out_S, K_S=K_S,
                     channels=channels, k_T=k_T, n_out=n_out)

    # b_tile=8 keeps >= 2 grid steps at this tiny test batch (both TensorCores
    # busy on v7x); for real batches leave the default (256) or larger.
    out = deep_ptp_pallas(parameters, W, in_S=in_S, out_S=out_S, K_S=K_S,
                          channels=channels, k_T=k_T, n_out=n_out, b_tile=8)
    jax.block_until_ready(out)

    ref = reference_forward(parameters, W, in_S=in_S, out_S=out_S, K_S=K_S,
                            channels=channels, k_T=k_T, n_out=n_out)
    err = float(jnp.max(jnp.abs(out - ref)))
    assert out.shape == (B, n_out), out.shape
    assert err < 1e-2, f"mismatch vs reference: {err}"
    print("KERNEL_OK")
</pallas_src>

<mosaic_0001>
module attributes {stable_mosaic.version = 11 : i64} {
  func.func @kernel(%arg0: i32, %arg1: memref<1x4x128xf32, #tpu.memory_space<vmem>>, %arg2: memref<8x128xf32, #tpu.memory_space<vmem>>, %arg3: memref<8x128xf32, #tpu.memory_space<vmem>>, %arg4: memref<1x5x8xf32, #tpu.memory_space<vmem>>) attributes {dimension_semantics = [#tpu.dimension_semantics<parallel>], iteration_bounds = array<i64: 2>, scalar_prefetch = 0 : i64, scratch_operands = 0 : i64, tpu.core_type = #tpu.core_type<tc>, window_params = [{transform_indices = @transform_0, window_bounds = array<i64: 1, 4, 128>}, {pipeline_mode = #tpu.pipeline_mode<synchronous>, transform_indices = @transform_1, window_bounds = array<i64: 8, 128>}, {pipeline_mode = #tpu.pipeline_mode<synchronous>, transform_indices = @transform_2, window_bounds = array<i64: 8, 128>}, {transform_indices = @transform_3, window_bounds = array<i64: 1, 5, 8>}]} {
    %c0 = arith.constant 0 : index
    %c0_0 = arith.constant 0 : index
    %c0_1 = arith.constant 0 : index
    %0 = vector.load %arg1[%c0, %c0_0, %c0_1] : memref<1x4x128xf32, #tpu.memory_space<vmem>>, vector<1x4x128xf32>
    %1 = vector.shape_cast %0 : vector<1x4x128xf32> to vector<4x128xf32>
    %c0_2 = arith.constant 0 : index
    %c0_3 = arith.constant 0 : index
    %2 = vector.load %arg2[%c0_2, %c0_3] : memref<8x128xf32, #tpu.memory_space<vmem>>, vector<8x128xf32>
    %c0_4 = arith.constant 0 : index
    %c0_5 = arith.constant 0 : index
    %3 = vector.load %arg3[%c0_4, %c0_5] : memref<8x128xf32, #tpu.memory_space<vmem>>, vector<8x128xf32>
    %cst = arith.constant 0.000000e+00 : f32
    %4 = vector.broadcast %cst : f32 to vector<6x128xf32>
    %5 = vector.extract_strided_slice %3 {offsets = [0, 0], sizes = [6, 1], strides = [1, 1]} : vector<8x128xf32> to vector<6x1xf32>
    %6 = vector.broadcast %5 : vector<6x1xf32> to vector<6x128xf32>
    %7 = arith.addf %4, %6 : vector<6x128xf32>
    %8 = vector.extract_strided_slice %2 {offsets = [0, 0], sizes = [6, 4], strides = [1, 1]} : vector<8x128xf32> to vector<6x4xf32>
    %cst_6 = arith.constant dense<0.000000e+00> : vector<6x128xf32>
    %9 = tpu.matmul %8, %1, %cst_6 {dimension_numbers = #tpu.dot_dimension_numbers<[1], [0], [0], [1], [0, 0, 1, 1], [], []>} : vector<6x4xf32>, vector<4x128xf32>, vector<6x128xf32> -> vector<6x128xf32>
    %10 = arith.addf %7, %9 : vector<6x128xf32>
    %11 = vector.extract_strided_slice %2 {offsets = [0, 4], sizes = [6, 4], strides = [1, 1]} : vector<8x128xf32> to vector<6x4xf32>
    %12 = vector.extract_strided_slice %1 {offsets = [0, 8], sizes = [4, 120], strides = [1, 1]} : vector<4x128xf32> to vector<4x120xf32>
    %cst_7 = arith.constant 0.000000e+00 : f32
    %13 = vector.broadcast %cst_7 : f32 to vector<4x8xf32>
    %14 = tpu.concatenate %12, %13 in 1 : vector<4x120xf32>, vector<4x8xf32> -> vector<4x128xf32>
    %cst_8 = arith.constant dense<0.000000e+00> : vector<6x128xf32>
    %15 = tpu.matmul %11, %14, %cst_8 {dimension_numbers = #tpu.dot_dimension_numbers<[1], [0], [0], [1], [0, 0, 1, 1], [], []>} : vector<6x4xf32>, vector<4x128xf32>, vector<6x128xf32> -> vector<6x128xf32>
    %16 = arith.addf %10, %15 : vector<6x128xf32>
    %17 = vector.extract_strided_slice %2 {offsets = [0, 8], sizes = [6, 4], strides = [1, 1]} : vector<8x128xf32> to vector<6x4xf32>
    %18 = vector.extract_strided_slice %1 {offsets = [0, 16], sizes = [4, 112], strides = [1, 1]} : vector<4x128xf32> to vector<4x112xf32>
    %cst_9 = arith.constant 0.000000e+00 : f32
    %19 = vector.broadcast %cst_9 : f32 to vector<4x16xf32>
    %20 = tpu.concatenate %18, %19 in 1 : vector<4x112xf32>, vector<4x16xf32> -> vector<4x128xf32>
    %cst_10 = arith.constant dense<0.000000e+00> : vector<6x128xf32>
    %21 = tpu.matmul %17, %20, %cst_10 {dimension_numbers = #tpu.dot_dimension_numbers<[1], [0], [0], [1], [0, 0, 1, 1], [], []>} : vector<6x4xf32>, vector<4x128xf32>, vector<6x128xf32> -> vector<6x128xf32>
    %22 = arith.addf %16, %21 : vector<6x128xf32>
    %23 = tpu.iota {dimensions = array<i32: 0>} : vector<6x128xi32>
    %c4_i32 = arith.constant 4 : i32
    %24 = vector.broadcast %c4_i32 : i32 to vector<6x128xi32>
    %25 = arith.cmpi slt, %23, %24 : vector<6x128xi32>
    %cst_11 = arith.constant 0.000000e+00 : f32
    %26 = vector.broadcast %cst_11 : f32 to vector<6x128xf32>
    %27 = arith.cmpf olt, %22, %26 : vector<6x128xf32>
    %28 = arith.andi %25, %27 : vector<6x128xi1>
    %cst_12 = arith.constant 0.000000e+00 : f32
    %29 = vector.broadcast %cst_12 : f32 to vector<6x128xf32>
    %30 = arith.minimumf %22, %29 : vector<6x128xf32>
    %31 = math.exp %30 : vector<6x128xf32>
    %cst_13 = arith.constant 1.000000e+00 : f32
    %32 = vector.broadcast %cst_13 : f32 to vector<6x128xf32>
    %33 = arith.subf %31, %32 : vector<6x128xf32>
    %34 = arith.select %28, %33, %22 : vector<6x128xi1>, vector<6x128xf32>
    %35 = vector.extract_strided_slice %2 {offsets = [0, 40], sizes = [8, 6], strides = [1, 1]} : vector<8x128xf32> to vector<8x6xf32>
    %cst_14 = arith.constant dense<0.000000e+00> : vector<8x128xf32>
    %36 = tpu.matmul %35, %34, %cst_14 {dimension_numbers = #tpu.dot_dimension_numbers<[1], [0], [0], [1], [0, 0, 1, 1], [], []>} : vector<8x6xf32>, vector<6x128xf32>, vector<8x128xf32> -> vector<8x128xf32>
    %37 = vector.extract_strided_slice %3 {offsets = [0, 3], sizes = [8, 1], strides = [1, 1]} : vector<8x128xf32> to vector<8x1xf32>
    %38 = vector.broadcast %37 : vector<8x1xf32> to vector<8x128xf32>
    %39 = arith.addf %36, %38 : vector<8x128xf32>
    %cst_15 = arith.constant 0.000000e+00 : f32
    %40 = vector.broadcast %cst_15 : f32 to vector<8x128xf32>
    %41 = vector.extract_strided_slice %3 {offsets = [0, 1], sizes = [8, 1], strides = [1, 1]} : vector<8x128xf32> to vector<8x1xf32>
    %42 = vector.broadcast %41 : vector<8x1xf32> to vector<8x128xf32>
    %43 = arith.addf %40, %42 : vector<8x128xf32>
    %44 = vector.extract_strided_slice %2 {offsets = [0, 12], sizes = [8, 6], strides = [1, 1]} : vector<8x128xf32> to vector<8x6xf32>
    %cst_16 = arith.constant 0.000000e+00 : f32
    %45 = vector.broadcast %cst_16 : f32 to vector<6x8xf32>
    %46 = vector.extract_strided_slice %34 {offsets = [0, 0], sizes = [6, 120], strides = [1, 1]} : vector<6x128xf32> to vector<6x120xf32>
    %47 = tpu.concatenate %45, %46 in 1 : vector<6x8xf32>, vector<6x120xf32> -> vector<6x128xf32>
    %cst_17 = arith.constant dense<0.000000e+00> : vector<8x128xf32>
    %48 = tpu.matmul %44, %47, %cst_17 {dimension_numbers = #tpu.dot_dimension_numbers<[1], [0], [0], [1], [0, 0, 1, 1], [], []>} : vector<8x6xf32>, vector<6x128xf32>, vector<8x128xf32> -> vector<8x128xf32>
    %49 = arith.addf %43, %48 : vector<8x128xf32>
    %50 = vector.extract_strided_slice %2 {offsets = [0, 18], sizes = [8, 6], strides = [1, 1]} : vector<8x128xf32> to vector<8x6xf32>
    %cst_18 = arith.constant dense<0.000000e+00> : vector<8x128xf32>
    %51 = tpu.matmul %50, %34, %cst_18 {dimension_numbers = #tpu.dot_dimension_numbers<[1], [0], [0], [1], [0, 0, 1, 1], [], []>} : vector<8x6xf32>, vector<6x128xf32>, vector<8x128xf32> -> vector<8x128xf32>
    %52 = arith.addf %49, %51 : vector<8x128xf32>
    %cst_19 = arith.constant 0.000000e+00 : f32
    %53 = vector.broadcast %cst_19 : f32 to vector<8x128xf32>
    %54 = arith.maximumf %52, %53 : vector<8x128xf32>
    %cst_20 = arith.constant 0.000000e+00 : f32
    %55 = vector.broadcast %cst_20 : f32 to vector<8x128xf32>
    %56 = vector.extract_strided_slice %3 {offsets = [0, 2], sizes = [8, 1], strides = [1, 1]} : vector<8x128xf32> to vector<8x1xf32>
    %57 = vector.broadcast %56 : vector<8x1xf32> to vector<8x128xf32>
    %58 = arith.addf %55, %57 : vector<8x128xf32>
    %59 = vector.extract_strided_slice %2 {offsets = [0, 24], sizes = [8, 8], strides = [1, 1]} : vector<8x128xf32> to vector<8x8xf32>
    %cst_21 = arith.constant 0.000000e+00 : f32
    %60 = vector.broadcast %cst_21 : f32 to vector<8x8xf32>
    %61 = vector.extract_strided_slice %54 {offsets = [0, 0], sizes = [8, 120], strides = [1, 1]} : vector<8x128xf32> to vector<8x120xf32>
    %62 = tpu.concatenate %60, %61 in 1 : vector<8x8xf32>, vector<8x120xf32> -> vector<8x128xf32>
    %cst_22 = arith.constant dense<0.000000e+00> : vector<8x128xf32>
    %63 = tpu.matmul %59, %62, %cst_22 {dimension_numbers = #tpu.dot_dimension_numbers<[1], [0], [0], [1], [0, 0, 1, 1], [], []>} : vector<8x8xf32>, vector<8x128xf32>, vector<8x128xf32> -> vector<8x128xf32>
    %64 = arith.addf %58, %63 : vector<8x128xf32>
    %65 = vector.extract_strided_slice %2 {offsets = [0, 32], sizes = [8, 8], strides = [1, 1]} : vector<8x128xf32> to vector<8x8xf32>
    %cst_23 = arith.constant dense<0.000000e+00> : vector<8x128xf32>
    %66 = tpu.matmul %65, %54, %cst_23 {dimension_numbers = #tpu.dot_dimension_numbers<[1], [0], [0], [1], [0, 0, 1, 1], [], []>} : vector<8x8xf32>, vector<8x128xf32>, vector<8x128xf32> -> vector<8x128xf32>
    %67 = arith.addf %64, %66 : vector<8x128xf32>
    %cst_24 = arith.constant 0.000000e+00 : f32
    %68 = vector.broadcast %cst_24 : f32 to vector<8x128xf32>
    %69 = arith.maximumf %67, %68 : vector<8x128xf32>
    %70 = arith.addf %69, %39 : vector<8x128xf32>
    %cst_25 = arith.constant 0.000000e+00 : f32
    %71 = vector.broadcast %cst_25 : f32 to vector<8x128xf32>
    %72 = arith.maximumf %70, %71 : vector<8x128xf32>
    %73 = vector.extract_strided_slice %2 {offsets = [0, 78], sizes = [8, 8], strides = [1, 1]} : vector<8x128xf32> to vector<8x8xf32>
    %cst_26 = arith.constant dense<0.000000e+00> : vector<8x128xf32>
    %74 = tpu.matmul %73, %72, %cst_26 {dimension_numbers = #tpu.dot_dimension_numbers<[1], [0], [0], [1], [0, 0, 1, 1], [], []>} : vector<8x8xf32>, vector<8x128xf32>, vector<8x128xf32> -> vector<8x128xf32>
    %75 = vector.extract_strided_slice %3 {offsets = [0, 6], sizes = [8, 1], strides = [1, 1]} : vector<8x128xf32> to vector<8x1xf32>
    %76 = vector.broadcast %75 : vector<8x1xf32> to vector<8x128xf32>
    %77 = arith.addf %74, %76 : vector<8x128xf32>
    %cst_27 = arith.constant 0.000000e+00 : f32
    %78 = vector.broadcast %cst_27 : f32 to vector<8x128xf32>
    %79 = vector.extract_strided_slice %3 {offsets = [0, 4], sizes = [8, 1], strides = [1, 1]} : vector<8x128xf32> to vector<8x1xf32>
    %80 = vector.broadcast %79 : vector<8x1xf32> to vector<8x128xf32>
    %81 = arith.addf %78, %80 : vector<8x128xf32>
    %82 = vector.extract_strided_slice %2 {offsets = [0, 46], sizes = [8, 8], strides = [1, 1]} : vector<8x128xf32> to vector<8x8xf32>
    %cst_28 = arith.constant 0.000000e+00 : f32
    %83 = vector.broadcast %cst_28 : f32 to vector<8x16xf32>
    %84 = vector.extract_strided_slice %72 {offsets = [0, 0], sizes = [8, 112], strides = [1, 1]} : vector<8x128xf32> to vector<8x112xf32>
    %85 = tpu.concatenate %83, %84 in 1 : vector<8x16xf32>, vector<8x112xf32> -> vector<8x128xf32>
    %cst_29 = arith.constant dense<0.000000e+00> : vector<8x128xf32>
    %86 = tpu.matmul %82, %85, %cst_29 {dimension_numbers = #tpu.dot_dimension_numbers<[1], [0], [0], [1], [0, 0, 1, 1], [], []>} : vector<8x8xf32>, vector<8x128xf32>, vector<8x128xf32> -> vector<8x128xf32>
    %87 = arith.addf %81, %86 : vector<8x128xf32>
    %88 = vector.extract_strided_slice %2 {offsets = [0, 54], sizes = [8, 8], strides = [1, 1]} : vector<8x128xf32> to vector<8x8xf32>
    %cst_30 = arith.constant dense<0.000000e+00> : vector<8x128xf32>
    %89 = tpu.matmul %88, %72, %cst_30 {dimension_numbers = #tpu.dot_dimension_numbers<[1], [0], [0], [1], [0, 0, 1, 1], [], []>} : vector<8x8xf32>, vector<8x128xf32>, vector<8x128xf32> -> vector<8x128xf32>
    %90 = arith.addf %87, %89 : vector<8x128xf32>
    %cst_31 = arith.constant 0.000000e+00 : f32
    %91 = vector.broadcast %cst_31 : f32 to vector<8x128xf32>
    %92 = arith.maximumf %90, %91 : vector<8x128xf32>
    %cst_32 = arith.constant 0.000000e+00 : f32
    %93 = vector.broadcast %cst_32 : f32 to vector<8x128xf32>
    %94 = vector.extract_strided_slice %3 {offsets = [0, 5], sizes = [8, 1], strides = [1, 1]} : vector<8x128xf32> to vector<8x1xf32>
    %95 = vector.broadcast %94 : vector<8x1xf32> to vector<8x128xf32>
    %96 = arith.addf %93, %95 : vector<8x128xf32>
    %97 = vector.extract_strided_slice %2 {offsets = [0, 62], sizes = [8, 8], strides = [1, 1]} : vector<8x128xf32> to vector<8x8xf32>
    %cst_33 = arith.constant 0.000000e+00 : f32
    %98 = vector.broadcast %cst_33 : f32 to vector<8x16xf32>
    %99 = vector.extract_strided_slice %92 {offsets = [0, 0], sizes = [8, 112], strides = [1, 1]} : vector<8x128xf32> to vector<8x112xf32>
    %100 = tpu.concatenate %98, %99 in 1 : vector<8x16xf32>, vector<8x112xf32> -> vector<8x128xf32>
    %cst_34 = arith.constant dense<0.000000e+00> : vector<8x128xf32>
    %101 = tpu.matmul %97, %100, %cst_34 {dimension_numbers = #tpu.dot_dimension_numbers<[1], [0], [0], [1], [0, 0, 1, 1], [], []>} : vector<8x8xf32>, vector<8x128xf32>, vector<8x128xf32> -> vector<8x128xf32>
    %102 = arith.addf %96, %101 : vector<8x128xf32>
    %103 = vector.extract_strided_slice %2 {offsets = [0, 70], sizes = [8, 8], strides = [1, 1]} : vector<8x128xf32> to vector<8x8xf32>
    %cst_35 = arith.constant dense<0.000000e+00> : vector<8x128xf32>
    %104 = tpu.matmul %103, %92, %cst_35 {dimension_numbers = #tpu.dot_dimension_numbers<[1], [0], [0], [1], [0, 0, 1, 1], [], []>} : vector<8x8xf32>, vector<8x128xf32>, vector<8x128xf32> -> vector<8x128xf32>
    %105 = arith.addf %102, %104 : vector<8x128xf32>
    %cst_36 = arith.constant 0.000000e+00 : f32
    %106 = vector.broadcast %cst_36 : f32 to vector<8x128xf32>
    %107 = arith.maximumf %105, %106 : vector<8x128xf32>
    %108 = arith.addf %107, %77 : vector<8x128xf32>
    %cst_37 = arith.constant 0.000000e+00 : f32
    %109 = vector.broadcast %cst_37 : f32 to vector<8x128xf32>
    %110 = arith.maximumf %108, %109 : vector<8x128xf32>
    %111 = vector.extract_strided_slice %110 {offsets = [0, 104], sizes = [8, 8], strides = [1, 1]} : vector<8x128xf32> to vector<8x8xf32>
    %112 = vector.extract_strided_slice %2 {offsets = [0, 86], sizes = [5, 8], strides = [1, 1]} : vector<8x128xf32> to vector<5x8xf32>
    %cst_38 = arith.constant dense<0.000000e+00> : vector<5x8xf32>
    %113 = tpu.matmul %112, %111, %cst_38 {dimension_numbers = #tpu.dot_dimension_numbers<[1], [0], [0], [1], [0, 0, 1, 1], [], []>} : vector<5x8xf32>, vector<8x8xf32>, vector<5x8xf32> -> vector<5x8xf32>
    %114 = vector.extract_strided_slice %3 {offsets = [0, 7], sizes = [5, 1], strides = [1, 1]} : vector<8x128xf32> to vector<5x1xf32>
    %115 = vector.broadcast %114 : vector<5x1xf32> to vector<5x8xf32>
    %116 = arith.addf %113, %115 : vector<5x8xf32>
    %cst_39 = arith.constant dense<0xFF800000> : vector<8xf32>
    %117 = vector.multi_reduction <maximumf>, %116, %cst_39 [0] : vector<5x8xf32> to vector<8xf32>
    %118 = vector.shape_cast %117 : vector<8xf32> to vector<1x8xf32>
    %119 = vector.broadcast %118 : vector<1x8xf32> to vector<5x8xf32>
    %120 = arith.subf %116, %119 : vector<5x8xf32>
    %121 = math.exp %120 : vector<5x8xf32>
    %cst_40 = arith.constant dense<0.000000e+00> : vector<8xf32>
    %122 = vector.multi_reduction <add>, %121, %cst_40 [0] : vector<5x8xf32> to vector<8xf32>
    %123 = vector.shape_cast %122 : vector<8xf32> to vector<1x8xf32>
    %124 = math.log %123 : vector<1x8xf32>
    %125 = vector.broadcast %124 : vector<1x8xf32> to vector<5x8xf32>
    %126 = arith.subf %120, %125 : vector<5x8xf32>
    %127 = vector.shape_cast %126 : vector<5x8xf32> to vector<1x5x8xf32>
    %c0_41 = arith.constant 0 : index
    %c0_42 = arith.constant 0 : index
    %c0_43 = arith.constant 0 : index
    %128 = vector.load %arg4[%c0_41, %c0_42, %c0_43] : memref<1x5x8xf32, #tpu.memory_space<vmem>>, vector<1x5x8xf32>
    tpu.vector_store %arg4[%c0_41, %c0_42, %c0_43], %127 {strides = array<i32>} : memref<1x5x8xf32, #tpu.memory_space<vmem>>, vector<1x5x8xf32>,
    return
  }
  func.func @transform_0(%arg0: i32) -> (i32, i32, i32) {
    %c0_i32 = arith.constant 0 : i32
    %c0_i32_0 = arith.constant 0 : i32
    %c0_i32_1 = arith.constant 0 : i32
    return %arg0, %c0_i32, %c0_i32_0 : i32, i32, i32
  }
  func.func @transform_1(%arg0: i32) -> (i32, i32) {
    %c0_i32 = arith.constant 0 : i32
    %c0_i32_0 = arith.constant 0 : i32
    %c0_i32_1 = arith.constant 0 : i32
    return %c0_i32, %c0_i32_0 : i32, i32
  }
  func.func @transform_2(%arg0: i32) -> (i32, i32) {
    %c0_i32 = arith.constant 0 : i32
    %c0_i32_0 = arith.constant 0 : i32
    %c0_i32_1 = arith.constant 0 : i32
    return %c0_i32, %c0_i32_0 : i32, i32
  }
  func.func @transform_3(%arg0: i32) -> (i32, i32, i32) {
    %c0_i32 = arith.constant 0 : i32
    %c0_i32_0 = arith.constant 0 : i32
    %c0_i32_1 = arith.constant 0 : i32
    return %arg0, %c0_i32, %c0_i32_0 : i32, i32, i32
  }
}

</mosaic_0001>

<llo_original>
// kernel: tpu_custom_call.1
$region0: #{tpu_custom_call.1}
  #allocation0 [shape = 'u32[]', space=smem, size = 0x4, offset = 0x4, fixed_abs, tag = 'smem constant byte address 0x4 - core index']
  #allocation1 [shape = 'u32[144,128]{1,0:T(1,128)}', space=vmem, size = 0x12000, scoped, tag = 'internal scratch']
  %s0 = inlined_call_operand.hbm [shape: f32[2,4,128], index: 0, kind: input, shape index: {}]
  %s1 = inlined_call_operand.hbm [shape: f32[8,128], index: 1, kind: input, shape index: {}]
  %s2 = inlined_call_operand.hbm [shape: f32[8,128], index: 2, kind: input, shape index: {}]
  %s3 = inlined_call_operand.vmem [shape: f32[2,5,8], index: 3, kind: output, shape index: {}]
  %s4 = sld [smem:[#allocation0]]
  $region57: #{tpu_custom_call.1} parent=0
    _
  %s6 = ssub.s32 1, %s4
  %s7 = scalar_select 0, %s6, %s4
  $region1: #{tpu_custom_call.1} parent=0
    #allocation2 [shape = 'u8[4096]{0}', space=vmem, size = 0x1000, scoped, tag = 'input window, operand 0']
    #allocation3 [shape = 's32[2]{0}', space=sflag, size = 0x8, scoped, tag = 'scoped memory for tpu_custom_call.1']
    #allocation4 [shape = 'u8[4096]{0}', space=vmem, size = 0x1000, scoped, tag = 'input window, operand 1, single buffered']
    #allocation5 [shape = 's32[1]{0}', space=sflag, size = 0x4, scoped, tag = 'scoped memory for tpu_custom_call.1']
    #allocation6 [shape = 'u8[4096]{0}', space=vmem, size = 0x1000, scoped, tag = 'input window, operand 2, single buffered']
    %8 = vsyncpa [#allocation3], 0
    %s9 = scalar_lea.sflag [#allocation3], 1
    %10 = vsyncpa %s9, 0
    %11 = vsyncpa [#allocation5], 0
    loop: start=0, step=1, limit=4
    $region2: #{tpu_custom_call.1} parent=1 // loop_pre_header
      _
    $region3: #{tpu_custom_call.1} parent=1 // loop_header
      %s13 = sphi 0, %s17
      %p14 = scmp.ge.s32.totalorder %s13, 4
      %s23 = sphi 0, %s25
      %s26 = sphi 0, %s23
      %s27 = sphi 0, %s26
      %s43 = sphi 0, %s27
      %s47 = sphi 0, %s47
      %s49 = sphi 0, %s47
      %s50 = sphi 0, %s49
      %s64 = sphi 0, %s50
      %s68 = sphi 0, %s68
      %s70 = sphi 0, %s68
      %s71 = sphi 0, %s70
      %s85 = sphi 0, %s71
      %s91 = sphi 0, %s93
      %s94 = sphi 0, %s91
      %s95 = sphi 0, %s94
      %s111 = sphi 0, %s95
    $region4: #{tpu_custom_call.1} parent=1 // loop_header_branch
      %16 = sbr.rel (%p14) target = $region8
    $region5: #{tpu_custom_call.1} parent=1 // loop_body
      %s18 = ssub.s32 %s13, 1
      %s19 = ssub.s32 %s13, 2
      %s20 = sadd.s32 %s13, 1
      %s21 = ssub.s32 %s13, %s20
      %p22 = scmp.eq.s32.totalorder %s21, 0
      %s24 = sadd.s32 %s23, 1
      %s25 = scalar_select %p22, %s23, %s24
      %p28 = pneg %p22
      %p29 = scmp.eq.s32.totalorder %s13, 1
      %p30 = por %p28, %p29
      %p31 = scmp.ne.s32.totalorder %s23, %s26
      %p32 = scmp.eq.s32.totalorder %s13, 0
      %p33 = por %p31, %p32
      %p34 = scmp.ne.s32.totalorder %s23, %s26
      %p35 = scmp.eq.s32.totalorder %s18, 1
      %p36 = por %p34, %p35
      %p37 = scmp.ne.s32.totalorder %s26, %s27
      %p38 = scmp.eq.s32.totalorder %s18, 0
      %p39 = por %p37, %p38
      %p40 = scmp.ne.s32.totalorder %s26, %s27
      %p41 = scmp.eq.s32.totalorder %s19, 1
      %p42 = por %p40, %p41
      %p44 = scmp.ne.s32.totalorder %s27, %s43
      %p45 = scmp.eq.s32.totalorder %s19, 0
      %p46 = por %p44, %p45
      %s48 = sadd.s32 %s47, 1
      %p51 = scmp.eq.s32.totalorder %s13, 1
      %p52 = scmp.ne.s32.totalorder %s47, %s49
      %p53 = scmp.eq.s32.totalorder %s13, 0
      %p54 = por %p52, %p53
      %p55 = scmp.ne.s32.totalorder %s47, %s49
      %p56 = scmp.eq.s32.totalorder %s18, 1
      %p57 = por %p55, %p56
      %p58 = scmp.ne.s32.totalorder %s49, %s50
      %p59 = scmp.eq.s32.totalorder %s18, 0
      %p60 = por %p58, %p59
      %p61 = scmp.ne.s32.totalorder %s49, %s50
      %p62 = scmp.eq.s32.totalorder %s19, 1
      %p63 = por %p61, %p62
      %p65 = scmp.ne.s32.totalorder %s50, %s64
      %p66 = scmp.eq.s32.totalorder %s19, 0
      %p67 = por %p65, %p66
      %s69 = sadd.s32 %s68, 1
      %p72 = scmp.eq.s32.totalorder %s13, 1
      %p73 = scmp.ne.s32.totalorder %s68, %s70
      %p74 = scmp.eq.s32.totalorder %s13, 0
      %p75 = por %p73, %p74
      %p76 = scmp.ne.s32.totalorder %s68, %s70
      %p77 = scmp.eq.s32.totalorder %s18, 1
      %p78 = por %p76, %p77
      %p79 = scmp.ne.s32.totalorder %s70, %s71
      %p80 = scmp.eq.s32.totalorder %s18, 0
      %p81 = por %p79, %p80
      %p82 = scmp.ne.s32.totalorder %s70, %s71
      %p83 = scmp.eq.s32.totalorder %s19, 1
      %p84 = por %p82, %p83
      %p86 = scmp.ne.s32.totalorder %s71, %s85
      %p87 = scmp.eq.s32.totalorder %s19, 0
      %p88 = por %p86, %p87
      %s89 = ssub.s32 %s13, %s20
      %p90 = scmp.eq.s32.totalorder %s89, 0
      %s92 = sadd.s32 %s91, 1
      %s93 = scalar_select %p90, %s91, %s92
      %p96 = pneg %p90
      %p97 = scmp.eq.s32.totalorder %s13, 1
      %p98 = por %p96, %p97
      %p99 = scmp.ne.s32.totalorder %s91, %s94
      %p100 = scmp.eq.s32.totalorder %s13, 0
      %p101 = por %p99, %p100
      %p102 = scmp.ne.s32.totalorder %s91, %s94
      %p103 = scmp.eq.s32.totalorder %s18, 1
      %p104 = por %p102, %p103
      %p105 = scmp.ne.s32.totalorder %s94, %s95
      %p106 = scmp.eq.s32.totalorder %s18, 0
      %p107 = por %p105, %p106
      %p108 = scmp.ne.s32.totalorder %s94, %s95
      %p109 = scmp.eq.s32.totalorder %s19, 1
      %p110 = por %p108, %p109
      %p112 = scmp.ne.s32.totalorder %s95, %s111
      %p113 = scmp.eq.s32.totalorder %s19, 0
      %p114 = por %p112, %p113
      %p115 = scmp.le.s32.totalorder 1, %s13
      %p116 = scmp.lt.s32.totalorder %s13, 3
      %p117 = pnand %p115, %p116
      %p118 = pneg %p117
      // Predicated region
      $region9: #{tpu_custom_call.1} parent=5 // pred_check
        _
      $region10: #{tpu_custom_call.1} parent=5 // pred_check_branch
        %120 = sbr.rel (%p117) target = $region12
      $region11: #{tpu_custom_call.1} parent=5 // pred_region
        %s121 = ssub.s32 %s13, 1
        // Predicated region
        $region13: #{tpu_custom_call.1} parent=11 // pred_check
          %p122 = pneg %p60
        $region14: #{tpu_custom_call.1} parent=11 // pred_check_branch
          %124 = sbr.rel (%p122) target = $region16
        $region15: #{tpu_custom_call.1} parent=11 // pred_region
          %s126 = ssub.s32 128, 128
          %127 = vsyncadd [#allocation5], %s126
          %s129 = sshll.u32 [#allocation4], 4
          %s130 = int_to_ptr.vmem [resolvable:$true] %s129
          %132 = dma.hbm_to_vmem [thread:$0]  %s1, 128, %s130, [#allocation5]
        $region16: #{tpu_custom_call.1} parent=11 // pred_fallthru
          _
        // Predicated region
        $region17: #{tpu_custom_call.1} parent=11 // pred_check
          %p133 = pneg %p81
        $region18: #{tpu_custom_call.1} parent=11 // pred_check_branch
          %135 = sbr.rel (%p133) target = $region20
        $region19: #{tpu_custom_call.1} parent=11 // pred_region
          %s137 = ssub.s32 128, 128
          %138 = vsyncadd [#allocation5], %s137
          %s140 = sshll.u32 [#allocation6], 4
          %s141 = int_to_ptr.vmem [resolvable:$true] %s140
          %143 = dma.hbm_to_vmem [thread:$0]  %s2, 128, %s141, [#allocation5]
        $region20: #{tpu_custom_call.1} parent=11 // pred_fallthru
          _
      $region12: #{tpu_custom_call.1} parent=5 // pred_fallthru
        _
      %p144 = scmp.lt.s32.totalorder %s13, 2
      // Predicated region
      $region21: #{tpu_custom_call.1} parent=5 // pred_check
        %p145 = pneg %p144
      $region22: #{tpu_custom_call.1} parent=5 // pred_check_branch
        %147 = sbr.rel (%p145) target = $region24
      $region23: #{tpu_custom_call.1} parent=5 // pred_region
        // Predicated region
        $region25: #{tpu_custom_call.1} parent=23 // pred_check
          %p148 = pneg %p33
        $region26: #{tpu_custom_call.1} parent=23 // pred_check_branch
          %150 = sbr.rel (%p148) target = $region28
        $region27: #{tpu_custom_call.1} parent=23 // pred_region
          %s151 = sand.u32 %s23, 1
          %s152 = scalar_lea.sflag [#allocation3], %s151
          %s153 = sand.u32 %s23, 1
          %s154 = smul.addr %s153, 4
          %s155 = scalar_lea.vmem [#allocation2], %s154
          %s157 = ssub.s32 64, 64
          %158 = vsyncadd %s152, %s157
          %s159 = smul.addr %s13, 64
          %s160 = scalar_lea.hbm %s0, %s159
          %s162 = sshll.u32 %s155, 4
          %s163 = int_to_ptr.vmem [resolvable:$true] %s162
          %165 = dma.hbm_to_vmem [thread:$0]  %s160, 64, %s163, %s152
        $region28: #{tpu_custom_call.1} parent=23 // pred_fallthru
          _
      $region24: #{tpu_custom_call.1} parent=5 // pred_fallthru
        _
      %p166 = scmp.le.s32.totalorder 1, %s13
      %p167 = scmp.lt.s32.totalorder %s13, 3
      %p168 = pnand %p166, %p167
      %p169 = pneg %p168
      // Predicated region
      $region29: #{tpu_custom_call.1} parent=5 // pred_check
        _
      $region30: #{tpu_custom_call.1} parent=5 // pred_check_branch
        %171 = sbr.rel (%p168) target = $region32
      $region31: #{tpu_custom_call.1} parent=5 // pred_region
        %s172 = ssub.s32 %s13, 1
        %s173 = sand.u32 %s26, 1
        %s174 = scalar_lea.sflag [#allocation3], %s173
        %s175 = sand.u32 %s26, 1
        %s176 = smul.addr %s175, 4
        %s177 = scalar_lea.vmem [#allocation2], %s176
        // Predicated region
        $region33: #{tpu_custom_call.1} parent=31 // pred_check
          %p178 = pneg %p39
        $region34: #{tpu_custom_call.1} parent=31 // pred_check_branch
          %180 = sbr.rel (%p178) target = $region36
        $region35: #{tpu_custom_call.1} parent=31 // pred_region
          %181 = dma.done %s174, 64
        $region36: #{tpu_custom_call.1} parent=31 // pred_fallthru
          _
        // Predicated region
        $region37: #{tpu_custom_call.1} parent=31 // pred_check
          %p182 = pneg %p60
        $region38: #{tpu_custom_call.1} parent=31 // pred_check_branch
          %184 = sbr.rel (%p182) target = $region40
        $region39: #{tpu_custom_call.1} parent=31 // pred_region
          %185 = dma.done [#allocation5], 128
        $region40: #{tpu_custom_call.1} parent=31 // pred_fallthru
          _
        // Predicated region
        $region41: #{tpu_custom_call.1} parent=31 // pred_check
          %p186 = pneg %p81
        $region42: #{tpu_custom_call.1} parent=31 // pred_check_branch
          %188 = sbr.rel (%p186) target = $region44
        $region43: #{tpu_custom_call.1} parent=31 // pred_region
          %189 = dma.done [#allocation5], 128
        $region44: #{tpu_custom_call.1} parent=31 // pred_fallthru
          _
        %s190 = sand.u32 %s26, 1
        %s191 = scalar_lea.sflag [#allocation3], %s190
        %s192 = sand.u32 %s26, 1
        %s193 = smul.addr %s192, 4
        %s194 = scalar_lea.vmem [#allocation2], %s193
        %p195 = pneg %p39
        %p196 = pneg %p36
        %p197 = pneg %p60
        %p198 = pneg %p57
        %p199 = pneg %p81
        %p200 = pneg %p78
        %p201 = pneg %p107
        %p202 = pneg %p104
        %p203 = scmp.lt.s32.totalorder %s18, 1
        %s204 = scalar_select %p203, %s18, 1
        %s205 = smul.addr %s204, 8
        %s206 = scalar_lea.vmem %s3, %s205
        %p207 = scmp.lt.s32.totalorder %s18, 1
        %s208 = scalar_select %p207, %s18, 1
        %s209 = smul.addr %s208, 8
        %s210 = scalar_lea.vmem %s3, %s209
        %v211 = vld [vmem:[%s177] sm:$0xf]
        %v212 = vld [vmem:[#allocation4] sm:$0xff]
        %v213 = vld [vmem:[#allocation6] sm:$0xff]
        %215 = vset.pattern.permute.xlu0 0
        %216 = vperm.xlu0 %215, %v213
        %v217 = vpop.permute.xlu0 %216
        %v219 = vadd.f32 %v217, 0.0
        %vm220 = vcmask 31744
        %v222 = vsel %vm220, %v212, 0
        %vm224 = vcmask 1043456
        %v226 = vsel %vm224, %v211, 0
        %228 = vmatprep.subr.mxu0 0.0
        %229 = vmatpush1.msra.mxu0 %v226
        %230 = vmatprep.subr.mxu0 0.0
        %231 = vmatpush1.msra.mxu0 0.0
        %232 = vmatprep.subr.mxu0 0.0
        %233 = vmatpush1.msra.mxu0 0.0
        %234 = vmatprep.subr.mxu0 0.0
        %235 = vmatpush1.msra.mxu0 0.0
        %236 = vmatprep.subr.mxu0 0.0
        %237 = vmatpush1.msra.mxu0 0.0
        %238 = vmatprep.subr.mxu0 0.0
        %239 = vmatpush1.msra.mxu0 0.0
        %240 = vmatprep.subr.mxu0 0.0
        %241 = vmatpush1.msra.mxu0 0.0
        %242 = vmatprep.subr.mxu0 0.0
        %243 = vmatpush1.msra.mxu0 0.0
        %244 = vmatprep.subr.mxu0 0.0
        %245 = vmatpush1.msra.mxu0 0.0
        %246 = vmatprep.subr.mxu0 0.0
        %247 = vmatpush1.msra.mxu0 0.0
        %248 = vmatprep.subr.mxu0 0.0
        %249 = vmatpush1.msra.mxu0 0.0
        %250 = vmatprep.subr.mxu0 0.0
        %251 = vmatpush1.msra.mxu0 0.0
        %252 = vmatprep.subr.mxu0 0.0
        %253 = vmatpush1.msra.mxu0 0.0
        %254 = vmatprep.subr.mxu0 0.0
        %255 = vmatpush1.msra.mxu0 0.0
        %256 = vmatprep.subr.mxu0 0.0
        %257 = vmatpush1.msra.mxu0 0.0
        %258 = vmatprep.subr.mxu0 0.0
        %259 = vmatpush1.msra.mxu0 0.0
        %260 = vmatprep.subr.mxu0 0.0
        %261 = vmatpush1.msra.mxu0 0.0
        %262 = vmatprep.subr.mxu0 0.0
        %263 = vmatpush1.msra.mxu0 0.0
        %264 = vmatprep.subr.mxu0 0.0
        %265 = vmatpush1.msra.mxu0 0.0
        %266 = vmatprep.subr.mxu0 0.0
        %267 = vmatpush1.msra.mxu0 0.0
        %268 = vmatprep.subr.mxu0 0.0
        %269 = vmatpush1.msra.mxu0 0.0
        %270 = vmatprep.subr.mxu0 0.0
        %271 = vmatpush1.msra.mxu0 0.0
        %272 = vmatprep.subr.mxu0 0.0
        %273 = vmatpush1.msra.mxu0 0.0
        %274 = vmatprep.subr.mxu0 0.0
        %275 = vmatpush1.msra.mxu0 0.0
        %276 = vmatprep.subr.mxu0 0.0
        %277 = vmatpush1.msra.mxu0 0.0
        %278 = vmatprep.subr.mxu0 0.0
        %279 = vmatpush1.msra.mxu0 0.0
        %280 = vmatprep.subr.mxu0 0.0
        %281 = vmatpush1.msra.mxu0 0.0
        %282 = vmatprep.subr.mxu0 0.0
        %283 = vmatpush1.msra.mxu0 0.0
        %284 = vmatprep.subr.mxu0 0.0
        %285 = vmatpush1.msra.mxu0 0.0
        %286 = vmatprep.subr.mxu0 0.0
        %287 = vmatpush1.msra.mxu0 0.0
        %288 = vmatprep.subr.mxu0 0.0
        %289 = vmatpush1.msra.mxu0 0.0
        %290 = vmatprep.subr.mxu0 0.0
        %291 = vmatpush1.msra.mxu0 0.0
        %292 = vmatprep.mubr.f32.mxu0 0.0
        %293 = vmatmul.mubr.f32.gmra.mrb[0].mxu0 %v222
        %v294 = vpop.f32.mrb[0].mxu0
        %v295 = vadd.f32 0.0, %v294
        %v296 = vpop.f32.mrb[0].mxu0
        %297 = vdwg.mxu0
        %v298 = vadd.f32 %v219, %v295
        %299 = vrot.lane.b32.xlu0 %v211, 120
        %v300 = vpop.permute.xlu0 %299
        %vm302 = vcmask 982016
        %v303 = vsel %vm302, %v300, 0.0
        %304 = vrot.lane.b32.xlu0 %v212, 124
        %v305 = vpop.permute.xlu0 %304
        %v306 = vsel %vm220, %v305, 0
        %v309 = vsel %vm224, %v303, 0
        %311 = vmatprep.subr.mxu0 0.0
        %312 = vmatpush1.msra.mxu0 %v309
        %313 = vmatprep.subr.mxu0 0.0
        %314 = vmatpush1.msra.mxu0 0.0
        %315 = vmatprep.subr.mxu0 0.0
        %316 = vmatpush1.msra.mxu0 0.0
        %317 = vmatprep.subr.mxu0 0.0
        %318 = vmatpush1.msra.mxu0 0.0
        %319 = vmatprep.subr.mxu0 0.0
        %320 = vmatpush1.msra.mxu0 0.0
        %321 = vmatprep.subr.mxu0 0.0
        %322 = vmatpush1.msra.mxu0 0.0
        %323 = vmatprep.subr.mxu0 0.0
        %324 = vmatpush1.msra.mxu0 0.0
        %325 = vmatprep.subr.mxu0 0.0
        %326 = vmatpush1.msra.mxu0 0.0
        %327 = vmatprep.subr.mxu0 0.0
        %328 = vmatpush1.msra.mxu0 0.0
        %329 = vmatprep.subr.mxu0 0.0
        %330 = vmatpush1.msra.mxu0 0.0
        %331 = vmatprep.subr.mxu0 0.0
        %332 = vmatpush1.msra.mxu0 0.0
        %333 = vmatprep.subr.mxu0 0.0
        %334 = vmatpush1.msra.mxu0 0.0
        %335 = vmatprep.subr.mxu0 0.0
        %336 = vmatpush1.msra.mxu0 0.0
        %337 = vmatprep.subr.mxu0 0.0
        %338 = vmatpush1.msra.mxu0 0.0
        %339 = vmatprep.subr.mxu0 0.0
        %340 = vmatpush1.msra.mxu0 0.0
        %341 = vmatprep.subr.mxu0 0.0
        %342 = vmatpush1.msra.mxu0 0.0
        %343 = vmatprep.subr.mxu0 0.0
        %344 = vmatpush1.msra.mxu0 0.0
        %345 = vmatprep.subr.mxu0 0.0
        %346 = vmatpush1.msra.mxu0 0.0
        %347 = vmatprep.subr.mxu0 0.0
        %348 = vmatpush1.msra.mxu0 0.0
        %349 = vmatprep.subr.mxu0 0.0
        %350 = vmatpush1.msra.mxu0 0.0
        %351 = vmatprep.subr.mxu0 0.0
        %352 = vmatpush1.msra.mxu0 0.0
        %353 = vmatprep.subr.mxu0 0.0
        %354 = vmatpush1.msra.mxu0 0.0
        %355 = vmatprep.subr.mxu0 0.0
        %356 = vmatpush1.msra.mxu0 0.0
        %357 = vmatprep.subr.mxu0 0.0
        %358 = vmatpush1.msra.mxu0 0.0
        %359 = vmatprep.subr.mxu0 0.0
        %360 = vmatpush1.msra.mxu0 0.0
        %361 = vmatprep.subr.mxu0 0.0
        %362 = vmatpush1.msra.mxu0 0.0
        %363 = vmatprep.subr.mxu0 0.0
        %364 = vmatpush1.msra.mxu0 0.0
        %365 = vmatprep.subr.mxu0 0.0
        %366 = vmatpush1.msra.mxu0 0.0
        %367 = vmatprep.subr.mxu0 0.0
        %368 = vmatpush1.msra.mxu0 0.0
        %369 = vmatprep.subr.mxu0 0.0
        %370 = vmatpush1.msra.mxu0 0.0
        %371 = vmatprep.subr.mxu0 0.0
        %372 = vmatpush1.msra.mxu0 0.0
        %373 = vmatprep.subr.mxu0 0.0
        %374 = vmatpush1.msra.mxu0 0.0
        %375 = vmatprep.mubr.f32.mxu0 0.0
        %376 = vmatmul.mubr.f32.gmra.mrb[0].mxu0 %v306
        %v377 = vpop.f32.mrb[0].mxu0
        %v378 = vadd.f32 0.0, %v377
        %v379 = vpop.f32.mrb[0].mxu0
        %380 = vdwg.mxu0
        %v381 = vadd.f32 %v298, %v378
        %382 = vrot.lane.b32.xlu0 %v211, 112
        %v383 = vpop.permute.xlu0 %382
        %vm385 = vcmask 916480
        %v386 = vsel %vm385, %v383, 0.0
        %387 = vrot.lane.b32.xlu0 %v212, 120
        %v388 = vpop.permute.xlu0 %387
        %v389 = vsel %vm220, %v388, 0
        %v392 = vsel %vm224, %v386, 0
        %394 = vmatprep.subr.mxu0 0.0
        %395 = vmatpush1.msra.mxu0 %v392
        %396 = vmatprep.subr.mxu0 0.0
        %397 = vmatpush1.msra.mxu0 0.0
        %398 = vmatprep.subr.mxu0 0.0
        %399 = vmatpush1.msra.mxu0 0.0
        %400 = vmatprep.subr.mxu0 0.0
        %401 = vmatpush1.msra.mxu0 0.0
        %402 = vmatprep.subr.mxu0 0.0
        %403 = vmatpush1.msra.mxu0 0.0
        %404 = vmatprep.subr.mxu0 0.0
        %405 = vmatpush1.msra.mxu0 0.0
        %406 = vmatprep.subr.mxu0 0.0
        %407 = vmatpush1.msra.mxu0 0.0
        %408 = vmatprep.subr.mxu0 0.0
        %409 = vmatpush1.msra.mxu0 0.0
        %410 = vmatprep.subr.mxu0 0.0
        %411 = vmatpush1.msra.mxu0 0.0
        %412 = vmatprep.subr.mxu0 0.0
        %413 = vmatpush1.msra.mxu0 0.0
        %414 = vmatprep.subr.mxu0 0.0
        %415 = vmatpush1.msra.mxu0 0.0
        %416 = vmatprep.subr.mxu0 0.0
        %417 = vmatpush1.msra.mxu0 0.0
        %418 = vmatprep.subr.mxu0 0.0
        %419 = vmatpush1.msra.mxu0 0.0
        %420 = vmatprep.subr.mxu0 0.0
        %421 = vmatpush1.msra.mxu0 0.0
        %422 = vmatprep.subr.mxu0 0.0
        %423 = vmatpush1.msra.mxu0 0.0
        %424 = vmatprep.subr.mxu0 0.0
        %425 = vmatpush1.msra.mxu0 0.0
        %426 = vmatprep.subr.mxu0 0.0
        %427 = vmatpush1.msra.mxu0 0.0
        %428 = vmatprep.subr.mxu0 0.0
        %429 = vmatpush1.msra.mxu0 0.0
        %430 = vmatprep.subr.mxu0 0.0
        %431 = vmatpush1.msra.mxu0 0.0
        %432 = vmatprep.subr.mxu0 0.0
        %433 = vmatpush1.msra.mxu0 0.0
        %434 = vmatprep.subr.mxu0 0.0
        %435 = vmatpush1.msra.mxu0 0.0
        %436 = vmatprep.subr.mxu0 0.0
        %437 = vmatpush1.msra.mxu0 0.0
        %438 = vmatprep.subr.mxu0 0.0
        %439 = vmatpush1.msra.mxu0 0.0
        %440 = vmatprep.subr.mxu0 0.0
        %441 = vmatpush1.msra.mxu0 0.0
        %442 = vmatprep.subr.mxu0 0.0
        %443 = vmatpush1.msra.mxu0 0.0
        %444 = vmatprep.subr.mxu0 0.0
        %445 = vmatpush1.msra.mxu0 0.0
        %446 = vmatprep.subr.mxu0 0.0
        %447 = vmatpush1.msra.mxu0 0.0
        %448 = vmatprep.subr.mxu0 0.0
        %449 = vmatpush1.msra.mxu0 0.0
        %450 = vmatprep.subr.mxu0 0.0
        %451 = vmatpush1.msra.mxu0 0.0
        %452 = vmatprep.subr.mxu0 0.0
        %453 = vmatpush1.msra.mxu0 0.0
        %454 = vmatprep.subr.mxu0 0.0
        %455 = vmatpush1.msra.mxu0 0.0
        %456 = vmatprep.subr.mxu0 0.0
        %457 = vmatpush1.msra.mxu0 0.0
        %458 = vmatprep.mubr.f32.mxu0 0.0
        %459 = vmatmul.mubr.f32.gmra.mrb[0].mxu0 %v389
        %v460 = vpop.f32.mrb[0].mxu0
        %v461 = vadd.f32 0.0, %v460
        %v462 = vpop.f32.mrb[0].mxu0
        %463 = vdwg.mxu0
        %v464 = vadd.f32 %v381, %v461
        %v465 = vlaneseq
        %v466 = vshrl.u32 %v465, 7
        %vm467 = vcmp.lt.s32.totalorder %v466, 4
        %vm468 = vcmp.lt.f32.partialorder %v464, 0.0
        %vm469 = vmand %vm467, %vm468
        %v470 = vmin.f32 %v464, 0.0
        %v471 = vmul.f32 %v470, 1.442695
        %v472 = vpow.pop %v471
        %v473 = vsub.f32 %v472, 1.0
        %v474 = vsel %vm469, %v473, %v464
        %475 = vset.pattern.permute.xlu0 3
        %476 = vperm.xlu0 %475, %v213
        %v477 = vpop.permute.xlu0 %476
        %479 = vrot.lane.b32.xlu0 %v212, 88
        %v480 = vpop.permute.xlu0 %479
        %vm481 = vcmask 48128
        %v482 = vsel %vm481, %v480, 0
        %vm484 = vcmask 1045504
        %v486 = vsel %vm484, %v474, 0
        %488 = vmatprep.subr.mxu0 0.0
        %489 = vmatpush1.msra.mxu0 %v486
        %490 = vmatprep.subr.mxu0 0.0
        %491 = vmatpush1.msra.mxu0 0.0
        %492 = vmatprep.subr.mxu0 0.0
        %493 = vmatpush1.msra.mxu0 0.0
        %494 = vmatprep.subr.mxu0 0.0
        %495 = vmatpush1.msra.mxu0 0.0
        %496 = vmatprep.subr.mxu0 0.0
        %497 = vmatpush1.msra.mxu0 0.0
        %498 = vmatprep.subr.mxu0 0.0
        %499 = vmatpush1.msra.mxu0 0.0
        %500 = vmatprep.subr.mxu0 0.0
        %501 = vmatpush1.msra.mxu0 0.0
        %502 = vmatprep.subr.mxu0 0.0
        %503 = vmatpush1.msra.mxu0 0.0
        %504 = vmatprep.subr.mxu0 0.0
        %505 = vmatpush1.msra.mxu0 0.0
        %506 = vmatprep.subr.mxu0 0.0
        %507 = vmatpush1.msra.mxu0 0.0
        %508 = vmatprep.subr.mxu0 0.0
        %509 = vmatpush1.msra.mxu0 0.0
        %510 = vmatprep.subr.mxu0 0.0
        %511 = vmatpush1.msra.mxu0 0.0
        %512 = vmatprep.subr.mxu0 0.0
        %513 = vmatpush1.msra.mxu0 0.0
        %514 = vmatprep.subr.mxu0 0.0
        %515 = vmatpush1.msra.mxu0 0.0
        %516 = vmatprep.subr.mxu0 0.0
        %517 = vmatpush1.msra.mxu0 0.0
        %518 = vmatprep.subr.mxu0 0.0
        %519 = vmatpush1.msra.mxu0 0.0
        %520 = vmatprep.subr.mxu0 0.0
        %521 = vmatpush1.msra.mxu0 0.0
        %522 = vmatprep.subr.mxu0 0.0
        %523 = vmatpush1.msra.mxu0 0.0
        %524 = vmatprep.subr.mxu0 0.0
        %525 = vmatpush1.msra.mxu0 0.0
        %526 = vmatprep.subr.mxu0 0.0
        %527 = vmatpush1.msra.mxu0 0.0
        %528 = vmatprep.subr.mxu0 0.0
        %529 = vmatpush1.msra.mxu0 0.0
        %530 = vmatprep.subr.mxu0 0.0
        %531 = vmatpush1.msra.mxu0 0.0
        %532 = vmatprep.subr.mxu0 0.0
        %533 = vmatpush1.msra.mxu0 0.0
        %534 = vmatprep.subr.mxu0 0.0
        %535 = vmatpush1.msra.mxu0 0.0
        %536 = vmatprep.subr.mxu0 0.0
        %537 = vmatpush1.msra.mxu0 0.0
        %538 = vmatprep.subr.mxu0 0.0
        %539 = vmatpush1.msra.mxu0 0.0
        %540 = vmatprep.subr.mxu0 0.0
        %541 = vmatpush1.msra.mxu0 0.0
        %542 = vmatprep.subr.mxu0 0.0
        %543 = vmatpush1.msra.mxu0 0.0
        %544 = vmatprep.subr.mxu0 0.0
        %545 = vmatpush1.msra.mxu0 0.0
        %546 = vmatprep.subr.mxu0 0.0
        %547 = vmatpush1.msra.mxu0 0.0
        %548 = vmatprep.subr.mxu0 0.0
        %549 = vmatpush1.msra.mxu0 0.0
        %550 = vmatprep.subr.mxu0 0.0
        %551 = vmatpush1.msra.mxu0 0.0
        %552 = vmatprep.mubr.f32.mxu0 0.0
        %553 = vmatmul.mubr.f32.gmra.mrb[0].mxu0 %v482
        %v554 = vpop.f32.mrb[0].mxu0
        %v555 = vadd.f32 %v477, %v554
        %v556 = vpop.f32.mrb[0].mxu0
        %557 = vdwg.mxu0
        %558 = vset.pattern.permute.xlu0 1
        %559 = vperm.xlu0 %558, %v213
        %v560 = vpop.permute.xlu0 %559
        %v562 = vadd.f32 %v560, 0.0
        %563 = vrot.lane.b32.xlu0 %v474, 8
        %v564 = vpop.permute.xlu0 %563
        %vm566 = vcmask 64512
        %v567 = vsel %vm566, 0.0, %v564
        %568 = vrot.lane.b32.xlu0 %v212, 116
        %v569 = vpop.permute.xlu0 %568
        %v570 = vsel %vm481, %v569, 0
        %v573 = vsel %vm484, %v567, 0
        %575 = vmatprep.subr.mxu0 0.0
        %576 = vmatpush1.msra.mxu0 %v573
        %577 = vmatprep.subr.mxu0 0.0
        %578 = vmatpush1.msra.mxu0 0.0
        %579 = vmatprep.subr.mxu0 0.0
        %580 = vmatpush1.msra.mxu0 0.0
        %581 = vmatprep.subr.mxu0 0.0
        %582 = vmatpush1.msra.mxu0 0.0
        %583 = vmatprep.subr.mxu0 0.0
        %584 = vmatpush1.msra.mxu0 0.0
        %585 = vmatprep.subr.mxu0 0.0
        %586 = vmatpush1.msra.mxu0 0.0
        %587 = vmatprep.subr.mxu0 0.0
        %588 = vmatpush1.msra.mxu0 0.0
        %589 = vmatprep.subr.mxu0 0.0
        %590 = vmatpush1.msra.mxu0 0.0
        %591 = vmatprep.subr.mxu0 0.0
        %592 = vmatpush1.msra.mxu0 0.0
        %593 = vmatprep.subr.mxu0 0.0
        %594 = vmatpush1.msra.mxu0 0.0
        %595 = vmatprep.subr.mxu0 0.0
        %596 = vmatpush1.msra.mxu0 0.0
        %597 = vmatprep.subr.mxu0 0.0
        %598 = vmatpush1.msra.mxu0 0.0
        %599 = vmatprep.subr.mxu0 0.0
        %600 = vmatpush1.msra.mxu0 0.0
        %601 = vmatprep.subr.mxu0 0.0
        %602 = vmatpush1.msra.mxu0 0.0
        %603 = vmatprep.subr.mxu0 0.0
        %604 = vmatpush1.msra.mxu0 0.0
        %605 = vmatprep.subr.mxu0 0.0
        %606 = vmatpush1.msra.mxu0 0.0
        %607 = vmatprep.subr.mxu0 0.0
        %608 = vmatpush1.msra.mxu0 0.0
        %609 = vmatprep.subr.mxu0 0.0
        %610 = vmatpush1.msra.mxu0 0.0
        %611 = vmatprep.subr.mxu0 0.0
        %612 = vmatpush1.msra.mxu0 0.0
        %613 = vmatprep.subr.mxu0 0.0
        %614 = vmatpush1.msra.mxu0 0.0
        %615 = vmatprep.subr.mxu0 0.0
        %616 = vmatpush1.msra.mxu0 0.0
        %617 = vmatprep.subr.mxu0 0.0
        %618 = vmatpush1.msra.mxu0 0.0
        %619 = vmatprep.subr.mxu0 0.0
        %620 = vmatpush1.msra.mxu0 0.0
        %621 = vmatprep.subr.mxu0 0.0
        %622 = vmatpush1.msra.mxu0 0.0
        %623 = vmatprep.subr.mxu0 0.0
        %624 = vmatpush1.msra.mxu0 0.0
        %625 = vmatprep.subr.mxu0 0.0
        %626 = vmatpush1.msra.mxu0 0.0
        %627 = vmatprep.subr.mxu0 0.0
        %628 = vmatpush1.msra.mxu0 0.0
        %629 = vmatprep.subr.mxu0 0.0
        %630 = vmatpush1.msra.mxu0 0.0
        %631 = vmatprep.subr.mxu0 0.0
        %632 = vmatpush1.msra.mxu0 0.0
        %633 = vmatprep.subr.mxu0 0.0
        %634 = vmatpush1.msra.mxu0 0.0
        %635 = vmatprep.subr.mxu0 0.0
        %636 = vmatpush1.msra.mxu0 0.0
        %637 = vmatprep.subr.mxu0 0.0
        %638 = vmatpush1.msra.mxu0 0.0
        %639 = vmatprep.mubr.f32.mxu0 0.0
        %640 = vmatmul.mubr.f32.gmra.mrb[0].mxu0 %v570
        %v641 = vpop.f32.mrb[0].mxu0
        %v642 = vadd.f32 0.0, %v641
        %v643 = vpop.f32.mrb[0].mxu0
        %644 = vdwg.mxu0
        %v645 = vadd.f32 %v562, %v642
        %646 = vrot.lane.b32.xlu0 %v212, 110
        %v647 = vpop.permute.xlu0 %646
        %v648 = vsel %vm481, %v647, 0
        %650 = vmatprep.subr.mxu0 0.0
        %651 = vmatpush1.msra.mxu0 %v486
        %652 = vmatprep.subr.mxu0 0.0
        %653 = vmatpush1.msra.mxu0 0.0
        %654 = vmatprep.subr.mxu0 0.0
        %655 = vmatpush1.msra.mxu0 0.0
        %656 = vmatprep.subr.mxu0 0.0
        %657 = vmatpush1.msra.mxu0 0.0
        %658 = vmatprep.subr.mxu0 0.0
        %659 = vmatpush1.msra.mxu0 0.0
        %660 = vmatprep.subr.mxu0 0.0
        %661 = vmatpush1.msra.mxu0 0.0
        %662 = vmatprep.subr.mxu0 0.0
        %663 = vmatpush1.msra.mxu0 0.0
        %664 = vmatprep.subr.mxu0 0.0
        %665 = vmatpush1.msra.mxu0 0.0
        %666 = vmatprep.subr.mxu0 0.0
        %667 = vmatpush1.msra.mxu0 0.0
        %668 = vmatprep.subr.mxu0 0.0
        %669 = vmatpush1.msra.mxu0 0.0
        %670 = vmatprep.subr.mxu0 0.0
        %671 = vmatpush1.msra.mxu0 0.0
        %672 = vmatprep.subr.mxu0 0.0
        %673 = vmatpush1.msra.mxu0 0.0
        %674 = vmatprep.subr.mxu0 0.0
        %675 = vmatpush1.msra.mxu0 0.0
        %676 = vmatprep.subr.mxu0 0.0
        %677 = vmatpush1.msra.mxu0 0.0
        %678 = vmatprep.subr.mxu0 0.0
        %679 = vmatpush1.msra.mxu0 0.0
        %680 = vmatprep.subr.mxu0 0.0
        %681 = vmatpush1.msra.mxu0 0.0
        %682 = vmatprep.subr.mxu0 0.0
        %683 = vmatpush1.msra.mxu0 0.0
        %684 = vmatprep.subr.mxu0 0.0
        %685 = vmatpush1.msra.mxu0 0.0
        %686 = vmatprep.subr.mxu0 0.0
        %687 = vmatpush1.msra.mxu0 0.0
        %688 = vmatprep.subr.mxu0 0.0
        %689 = vmatpush1.msra.mxu0 0.0
        %690 = vmatprep.subr.mxu0 0.0
        %691 = vmatpush1.msra.mxu0 0.0
        %692 = vmatprep.subr.mxu0 0.0
        %693 = vmatpush1.msra.mxu0 0.0
        %694 = vmatprep.subr.mxu0 0.0
        %695 = vmatpush1.msra.mxu0 0.0
        %696 = vmatprep.subr.mxu0 0.0
        %697 = vmatpush1.msra.mxu0 0.0
        %698 = vmatprep.subr.mxu0 0.0
        %699 = vmatpush1.msra.mxu0 0.0
        %700 = vmatprep.subr.mxu0 0.0
        %701 = vmatpush1.msra.mxu0 0.0
        %702 = vmatprep.subr.mxu0 0.0
        %703 = vmatpush1.msra.mxu0 0.0
        %704 = vmatprep.subr.mxu0 0.0
        %705 = vmatpush1.msra.mxu0 0.0
        %706 = vmatprep.subr.mxu0 0.0
        %707 = vmatpush1.msra.mxu0 0.0
        %708 = vmatprep.subr.mxu0 0.0
        %709 = vmatpush1.msra.mxu0 0.0
        %710 = vmatprep.subr.mxu0 0.0
        %711 = vmatpush1.msra.mxu0 0.0
        %712 = vmatprep.subr.mxu0 0.0
        %713 = vmatpush1.msra.mxu0 0.0
        %714 = vmatprep.mubr.f32.mxu0 0.0
        %715 = vmatmul.mubr.f32.gmra.mrb[0].mxu0 %v648
        %v716 = vpop.f32.mrb[0].mxu0
        %v717 = vadd.f32 0.0, %v716
        %v718 = vpop.f32.mrb[0].mxu0
        %719 = vdwg.mxu0
        %v720 = vadd.f32 %v645, %v717
        %v721 = vmax.f32 %v720, 0.0
        %722 = vset.pattern.permute.xlu0 2
        %723 = vperm.xlu0 %722, %v213
        %v724 = vpop.permute.xlu0 %723
        %v726 = vadd.f32 %v724, 0.0
        %728 = vrot.lane.b32.xlu0 %v721, 8
        %v729 = vpop.permute.xlu0 %728
        %v731 = vsel %vm566, 0.0, %v729
        %732 = vrot.lane.b32.xlu0 %v212, 104
        %v733 = vpop.permute.xlu0 %732
        %v734 = vsel %vm566, %v733, 0
        %736 = vmatprep.subr.mxu0 0.0
        %737 = vmatpush1.msra.mxu0 %v731
        %738 = vmatprep.subr.mxu0 0.0
        %739 = vmatpush1.msra.mxu0 0.0
        %740 = vmatprep.subr.mxu0 0.0
        %741 = vmatpush1.msra.mxu0 0.0
        %742 = vmatprep.subr.mxu0 0.0
        %743 = vmatpush1.msra.mxu0 0.0
        %744 = vmatprep.subr.mxu0 0.0
        %745 = vmatpush1.msra.mxu0 0.0
        %746 = vmatprep.subr.mxu0 0.0
        %747 = vmatpush1.msra.mxu0 0.0
        %748 = vmatprep.subr.mxu0 0.0
        %749 = vmatpush1.msra.mxu0 0.0
        %750 = vmatprep.subr.mxu0 0.0
        %751 = vmatpush1.msra.mxu0 0.0
        %752 = vmatprep.subr.mxu0 0.0
        %753 = vmatpush1.msra.mxu0 0.0
        %754 = vmatprep.subr.mxu0 0.0
        %755 = vmatpush1.msra.mxu0 0.0
        %756 = vmatprep.subr.mxu0 0.0
        %757 = vmatpush1.msra.mxu0 0.0
        %758 = vmatprep.subr.mxu0 0.0
        %759 = vmatpush1.msra.mxu0 0.0
        %760 = vmatprep.subr.mxu0 0.0
        %761 = vmatpush1.msra.mxu0 0.0
        %762 = vmatprep.subr.mxu0 0.0
        %763 = vmatpush1.msra.mxu0 0.0
        %764 = vmatprep.subr.mxu0 0.0
        %765 = vmatpush1.msra.mxu0 0.0
        %766 = vmatprep.subr.mxu0 0.0
        %767 = vmatpush1.msra.mxu0 0.0
        %768 = vmatprep.subr.mxu0 0.0
        %769 = vmatpush1.msra.mxu0 0.0
        %770 = vmatprep.subr.mxu0 0.0
        %771 = vmatpush1.msra.mxu0 0.0
        %772 = vmatprep.subr.mxu0 0.0
        %773 = vmatpush1.msra.mxu0 0.0
        %774 = vmatprep.subr.mxu0 0.0
        %775 = vmatpush1.msra.mxu0 0.0
        %776 = vmatprep.subr.mxu0 0.0
        %777 = vmatpush1.msra.mxu0 0.0
        %778 = vmatprep.subr.mxu0 0.0
        %779 = vmatpush1.msra.mxu0 0.0
        %780 = vmatprep.subr.mxu0 0.0
        %781 = vmatpush1.msra.mxu0 0.0
        %782 = vmatprep.subr.mxu0 0.0
        %783 = vmatpush1.msra.mxu0 0.0
        %784 = vmatprep.subr.mxu0 0.0
        %785 = vmatpush1.msra.mxu0 0.0
        %786 = vmatprep.subr.mxu0 0.0
        %787 = vmatpush1.msra.mxu0 0.0
        %788 = vmatprep.subr.mxu0 0.0
        %789 = vmatpush1.msra.mxu0 0.0
        %790 = vmatprep.subr.mxu0 0.0
        %791 = vmatpush1.msra.mxu0 0.0
        %792 = vmatprep.subr.mxu0 0.0
        %793 = vmatpush1.msra.mxu0 0.0
        %794 = vmatprep.subr.mxu0 0.0
        %795 = vmatpush1.msra.mxu0 0.0
        %796 = vmatprep.subr.mxu0 0.0
        %797 = vmatpush1.msra.mxu0 0.0
        %798 = vmatprep.subr.mxu0 0.0
        %799 = vmatpush1.msra.mxu0 0.0
        %800 = vmatprep.mubr.f32.mxu0 0.0
        %801 = vmatmul.mubr.f32.gmra.mrb[0].mxu0 %v734
        %v802 = vpop.f32.mrb[0].mxu0
        %v803 = vadd.f32 0.0, %v802
        %v804 = vpop.f32.mrb[0].mxu0
        %805 = vdwg.mxu0
        %v806 = vadd.f32 %v726, %v803
        %807 = vrot.lane.b32.xlu0 %v212, 96
        %v808 = vpop.permute.xlu0 %807
        %v809 = vsel %vm566, %v808, 0
        %811 = vmatprep.subr.mxu0 0.0
        %812 = vmatpush1.msra.mxu0 %v721
        %813 = vmatprep.subr.mxu0 0.0
        %814 = vmatpush1.msra.mxu0 0.0
        %815 = vmatprep.subr.mxu0 0.0
        %816 = vmatpush1.msra.mxu0 0.0
        %817 = vmatprep.subr.mxu0 0.0
        %818 = vmatpush1.msra.mxu0 0.0
        %819 = vmatprep.subr.mxu0 0.0
        %820 = vmatpush1.msra.mxu0 0.0
        %821 = vmatprep.subr.mxu0 0.0
        %822 = vmatpush1.msra.mxu0 0.0
        %823 = vmatprep.subr.mxu0 0.0
        %824 = vmatpush1.msra.mxu0 0.0
        %825 = vmatprep.subr.mxu0 0.0
        %826 = vmatpush1.msra.mxu0 0.0
        %827 = vmatprep.subr.mxu0 0.0
        %828 = vmatpush1.msra.mxu0 0.0
        %829 = vmatprep.subr.mxu0 0.0
        %830 = vmatpush1.msra.mxu0 0.0
        %831 = vmatprep.subr.mxu0 0.0
        %832 = vmatpush1.msra.mxu0 0.0
        %833 = vmatprep.subr.mxu0 0.0
        %834 = vmatpush1.msra.mxu0 0.0
        %835 = vmatprep.subr.mxu0 0.0
        %836 = vmatpush1.msra.mxu0 0.0
        %837 = vmatprep.subr.mxu0 0.0
        %838 = vmatpush1.msra.mxu0 0.0
        %839 = vmatprep.subr.mxu0 0.0
        %840 = vmatpush1.msra.mxu0 0.0
        %841 = vmatprep.subr.mxu0 0.0
        %842 = vmatpush1.msra.mxu0 0.0
        %843 = vmatprep.subr.mxu0 0.0
        %844 = vmatpush1.msra.mxu0 0.0
        %845 = vmatprep.subr.mxu0 0.0
        %846 = vmatpush1.msra.mxu0 0.0
        %847 = vmatprep.subr.mxu0 0.0
        %848 = vmatpush1.msra.mxu0 0.0
        %849 = vmatprep.subr.mxu0 0.0
        %850 = vmatpush1.msra.mxu0 0.0
        %851 = vmatprep.subr.mxu0 0.0
        %852 = vmatpush1.msra.mxu0 0.0
        %853 = vmatprep.subr.mxu0 0.0
        %854 = vmatpush1.msra.mxu0 0.0
        %855 = vmatprep.subr.mxu0 0.0
        %856 = vmatpush1.msra.mxu0 0.0
        %857 = vmatprep.subr.mxu0 0.0
        %858 = vmatpush1.msra.mxu0 0.0
        %859 = vmatprep.subr.mxu0 0.0
        %860 = vmatpush1.msra.mxu0 0.0
        %861 = vmatprep.subr.mxu0 0.0
        %862 = vmatpush1.msra.mxu0 0.0
        %863 = vmatprep.subr.mxu0 0.0
        %864 = vmatpush1.msra.mxu0 0.0
        %865 = vmatprep.subr.mxu0 0.0
        %866 = vmatpush1.msra.mxu0 0.0
        %867 = vmatprep.subr.mxu0 0.0
        %868 = vmatpush1.msra.mxu0 0.0
        %869 = vmatprep.subr.mxu0 0.0
        %870 = vmatpush1.msra.mxu0 0.0
        %871 = vmatprep.subr.mxu0 0.0
        %872 = vmatpush1.msra.mxu0 0.0
        %873 = vmatprep.subr.mxu0 0.0
        %874 = vmatpush1.msra.mxu0 0.0
        %875 = vmatprep.mubr.f32.mxu0 0.0
        %876 = vmatmul.mubr.f32.gmra.mrb[0].mxu0 %v809
        %v877 = vpop.f32.mrb[0].mxu0
        %v878 = vadd.f32 0.0, %v877
        %v879 = vpop.f32.mrb[0].mxu0
        %880 = vdwg.mxu0
        %v881 = vadd.f32 %v806, %v878
        %v882 = vmax.f32 %v881, 0.0
        %v883 = vadd.f32 %v882, %v555
        %v884 = vmax.f32 %v883, 0.0
        %885 = vset.pattern.permute.xlu0 6
        %886 = vperm.xlu0 %885, %v213
        %v887 = vpop.permute.xlu0 %886
        %889 = vrot.lane.b32.xlu0 %v212, 50
        %v890 = vpop.permute.xlu0 %889
        %v891 = vsel %vm566, %v890, 0
        %893 = vmatprep.subr.mxu0 0.0
        %894 = vmatpush1.msra.mxu0 %v884
        %895 = vmatprep.subr.mxu0 0.0
        %896 = vmatpush1.msra.mxu0 0.0
        %897 = vmatprep.subr.mxu0 0.0
        %898 = vmatpush1.msra.mxu0 0.0
        %899 = vmatprep.subr.mxu0 0.0
        %900 = vmatpush1.msra.mxu0 0.0
        %901 = vmatprep.subr.mxu0 0.0
        %902 = vmatpush1.msra.mxu0 0.0
        %903 = vmatprep.subr.mxu0 0.0
        %904 = vmatpush1.msra.mxu0 0.0
        %905 = vmatprep.subr.mxu0 0.0
        %906 = vmatpush1.msra.mxu0 0.0
        %907 = vmatprep.subr.mxu0 0.0
        %908 = vmatpush1.msra.mxu0 0.0
        %909 = vmatprep.subr.mxu0 0.0
        %910 = vmatpush1.msra.mxu0 0.0
        %911 = vmatprep.subr.mxu0 0.0
        %912 = vmatpush1.msra.mxu0 0.0
        %913 = vmatprep.subr.mxu0 0.0
        %914 = vmatpush1.msra.mxu0 0.0
        %915 = vmatprep.subr.mxu0 0.0
        %916 = vmatpush1.msra.mxu0 0.0
        %917 = vmatprep.subr.mxu0 0.0
        %918 = vmatpush1.msra.mxu0 0.0
        %919 = vmatprep.subr.mxu0 0.0
        %920 = vmatpush1.msra.mxu0 0.0
        %921 = vmatprep.subr.mxu0 0.0
        %922 = vmatpush1.msra.mxu0 0.0
        %923 = vmatprep.subr.mxu0 0.0
        %924 = vmatpush1.msra.mxu0 0.0
        %925 = vmatprep.subr.mxu0 0.0
        %926 = vmatpush1.msra.mxu0 0.0
        %927 = vmatprep.subr.mxu0 0.0
        %928 = vmatpush1.msra.mxu0 0.0
        %929 = vmatprep.subr.mxu0 0.0
        %930 = vmatpush1.msra.mxu0 0.0
        %931 = vmatprep.subr.mxu0 0.0
        %932 = vmatpush1.msra.mxu0 0.0
        %933 = vmatprep.subr.mxu0 0.0
        %934 = vmatpush1.msra.mxu0 0.0
        %935 = vmatprep.subr.mxu0 0.0
        %936 = vmatpush1.msra.mxu0 0.0
        %937 = vmatprep.subr.mxu0 0.0
        %938 = vmatpush1.msra.mxu0 0.0
        %939 = vmatprep.subr.mxu0 0.0
        %940 = vmatpush1.msra.mxu0 0.0
        %941 = vmatprep.subr.mxu0 0.0
        %942 = vmatpush1.msra.mxu0 0.0
        %943 = vmatprep.subr.mxu0 0.0
        %944 = vmatpush1.msra.mxu0 0.0
        %945 = vmatprep.subr.mxu0 0.0
        %946 = vmatpush1.msra.mxu0 0.0
        %947 = vmatprep.subr.mxu0 0.0
        %948 = vmatpush1.msra.mxu0 0.0
        %949 = vmatprep.subr.mxu0 0.0
        %950 = vmatpush1.msra.mxu0 0.0
        %951 = vmatprep.subr.mxu0 0.0
        %952 = vmatpush1.msra.mxu0 0.0
        %953 = vmatprep.subr.mxu0 0.0
        %954 = vmatpush1.msra.mxu0 0.0
        %955 = vmatprep.subr.mxu0 0.0
        %956 = vmatpush1.msra.mxu0 0.0
        %957 = vmatprep.mubr.f32.mxu0 0.0
        %958 = vmatmul.mubr.f32.gmra.mrb[0].mxu0 %v891
        %v959 = vpop.f32.mrb[0].mxu0
        %v960 = vadd.f32 %v887, %v959
        %v961 = vpop.f32.mrb[0].mxu0
        %962 = vdwg.mxu0
        %963 = vset.pattern.permute.xlu0 4
        %964 = vperm.xlu0 %963, %v213
        %v965 = vpop.permute.xlu0 %964
        %v967 = vadd.f32 %v965, 0.0
        %969 = vrot.lane.b32.xlu0 %v884, 16
        %v970 = vpop.permute.xlu0 %969
        %vm972 = vcmask 130048
        %v973 = vsel %vm972, 0.0, %v970
        %974 = vrot.lane.b32.xlu0 %v212, 82
        %v975 = vpop.permute.xlu0 %974
        %v976 = vsel %vm566, %v975, 0
        %978 = vmatprep.subr.mxu0 0.0
        %979 = vmatpush1.msra.mxu0 %v973
        %980 = vmatprep.subr.mxu0 0.0
        %981 = vmatpush1.msra.mxu0 0.0
        %982 = vmatprep.subr.mxu0 0.0
        %983 = vmatpush1.msra.mxu0 0.0
        %984 = vmatprep.subr.mxu0 0.0
        %985 = vmatpush1.msra.mxu0 0.0
        %986 = vmatprep.subr.mxu0 0.0
        %987 = vmatpush1.msra.mxu0 0.0
        %988 = vmatprep.subr.mxu0 0.0
        %989 = vmatpush1.msra.mxu0 0.0
        %990 = vmatprep.subr.mxu0 0.0
        %991 = vmatpush1.msra.mxu0 0.0
        %992 = vmatprep.subr.mxu0 0.0
        %993 = vmatpush1.msra.mxu0 0.0
        %994 = vmatprep.subr.mxu0 0.0
        %995 = vmatpush1.msra.mxu0 0.0
        %996 = vmatprep.subr.mxu0 0.0
        %997 = vmatpush1.msra.mxu0 0.0
        %998 = vmatprep.subr.mxu0 0.0
        %999 = vmatpush1.msra.mxu0 0.0
        %1000 = vmatprep.subr.mxu0 0.0
        %1001 = vmatpush1.msra.mxu0 0.0
        %1002 = vmatprep.subr.mxu0 0.0
        %1003 = vmatpush1.msra.mxu0 0.0
        %1004 = vmatprep.subr.mxu0 0.0
        %1005 = vmatpush1.msra.mxu0 0.0
        %1006 = vmatprep.subr.mxu0 0.0
        %1007 = vmatpush1.msra.mxu0 0.0
        %1008 = vmatprep.subr.mxu0 0.0
        %1009 = vmatpush1.msra.mxu0 0.0
        %1010 = vmatprep.subr.mxu0 0.0
        %1011 = vmatpush1.msra.mxu0 0.0
        %1012 = vmatprep.subr.mxu0 0.0
        %1013 = vmatpush1.msra.mxu0 0.0
        %1014 = vmatprep.subr.mxu0 0.0
        %1015 = vmatpush1.msra.mxu0 0.0
        %1016 = vmatprep.subr.mxu0 0.0
        %1017 = vmatpush1.msra.mxu0 0.0
        %1018 = vmatprep.subr.mxu0 0.0
        %1019 = vmatpush1.msra.mxu0 0.0
        %1020 = vmatprep.subr.mxu0 0.0
        %1021 = vmatpush1.msra.mxu0 0.0
        %1022 = vmatprep.subr.mxu0 0.0
        %1023 = vmatpush1.msra.mxu0 0.0
        %1024 = vmatprep.subr.mxu0 0.0
        %1025 = vmatpush1.msra.mxu0 0.0
        %1026 = vmatprep.subr.mxu0 0.0
        %1027 = vmatpush1.msra.mxu0 0.0
        %1028 = vmatprep.subr.mxu0 0.0
        %1029 = vmatpush1.msra.mxu0 0.0
        %1030 = vmatprep.subr.mxu0 0.0
        %1031 = vmatpush1.msra.mxu0 0.0
        %1032 = vmatprep.subr.mxu0 0.0
        %1033 = vmatpush1.msra.mxu0 0.0
        %1034 = vmatprep.subr.mxu0 0.0
        %1035 = vmatpush1.msra.mxu0 0.0
        %1036 = vmatprep.subr.mxu0 0.0
        %1037 = vmatpush1.msra.mxu0 0.0
        %1038 = vmatprep.subr.mxu0 0.0
        %1039 = vmatpush1.msra.mxu0 0.0
        %1040 = vmatprep.subr.mxu0 0.0
        %1041 = vmatpush1.msra.mxu0 0.0
        %1042 = vmatprep.mubr.f32.mxu0 0.0
        %1043 = vmatmul.mubr.f32.gmra.mrb[0].mxu0 %v976
        %v1044 = vpop.f32.mrb[0].mxu0
        %v1045 = vadd.f32 0.0, %v1044
        %v1046 = vpop.f32.mrb[0].mxu0
        %1047 = vdwg.mxu0
        %v1048 = vadd.f32 %v967, %v1045
        %1049 = vrot.lane.b32.xlu0 %v212, 74
        %v1050 = vpop.permute.xlu0 %1049
        %v1051 = vsel %vm566, %v1050, 0
        %1053 = vmatprep.subr.mxu0 0.0
        %1054 = vmatpush1.msra.mxu0 %v884
        %1055 = vmatprep.subr.mxu0 0.0
        %1056 = vmatpush1.msra.mxu0 0.0
        %1057 = vmatprep.subr.mxu0 0.0
        %1058 = vmatpush1.msra.mxu0 0.0
        %1059 = vmatprep.subr.mxu0 0.0
        %1060 = vmatpush1.msra.mxu0 0.0
        %1061 = vmatprep.subr.mxu0 0.0
        %1062 = vmatpush1.msra.mxu0 0.0
        %1063 = vmatprep.subr.mxu0 0.0
        %1064 = vmatpush1.msra.mxu0 0.0
        %1065 = vmatprep.subr.mxu0 0.0
        %1066 = vmatpush1.msra.mxu0 0.0
        %1067 = vmatprep.subr.mxu0 0.0
        %1068 = vmatpush1.msra.mxu0 0.0
        %1069 = vmatprep.subr.mxu0 0.0
        %1070 = vmatpush1.msra.mxu0 0.0
        %1071 = vmatprep.subr.mxu0 0.0
        %1072 = vmatpush1.msra.mxu0 0.0
        %1073 = vmatprep.subr.mxu0 0.0
        %1074 = vmatpush1.msra.mxu0 0.0
        %1075 = vmatprep.subr.mxu0 0.0
        %1076 = vmatpush1.msra.mxu0 0.0
        %1077 = vmatprep.subr.mxu0 0.0
        %1078 = vmatpush1.msra.mxu0 0.0
        %1079 = vmatprep.subr.mxu0 0.0
        %1080 = vmatpush1.msra.mxu0 0.0
        %1081 = vmatprep.subr.mxu0 0.0
        %1082 = vmatpush1.msra.mxu0 0.0
        %1083 = vmatprep.subr.mxu0 0.0
        %1084 = vmatpush1.msra.mxu0 0.0
        %1085 = vmatprep.subr.mxu0 0.0
        %1086 = vmatpush1.msra.mxu0 0.0
        %1087 = vmatprep.subr.mxu0 0.0
        %1088 = vmatpush1.msra.mxu0 0.0
        %1089 = vmatprep.subr.mxu0 0.0
        %1090 = vmatpush1.msra.mxu0 0.0
        %1091 = vmatprep.subr.mxu0 0.0
        %1092 = vmatpush1.msra.mxu0 0.0
        %1093 = vmatprep.subr.mxu0 0.0
        %1094 = vmatpush1.msra.mxu0 0.0
        %1095 = vmatprep.subr.mxu0 0.0
        %1096 = vmatpush1.msra.mxu0 0.0
        %1097 = vmatprep.subr.mxu0 0.0
        %1098 = vmatpush1.msra.mxu0 0.0
        %1099 = vmatprep.subr.mxu0 0.0
        %1100 = vmatpush1.msra.mxu0 0.0
        %1101 = vmatprep.subr.mxu0 0.0
        %1102 = vmatpush1.msra.mxu0 0.0
        %1103 = vmatprep.subr.mxu0 0.0
        %1104 = vmatpush1.msra.mxu0 0.0
        %1105 = vmatprep.subr.mxu0 0.0
        %1106 = vmatpush1.msra.mxu0 0.0
        %1107 = vmatprep.subr.mxu0 0.0
        %1108 = vmatpush1.msra.mxu0 0.0
        %1109 = vmatprep.subr.mxu0 0.0
        %1110 = vmatpush1.msra.mxu0 0.0
        %1111 = vmatprep.subr.mxu0 0.0
        %1112 = vmatpush1.msra.mxu0 0.0
        %1113 = vmatprep.subr.mxu0 0.0
        %1114 = vmatpush1.msra.mxu0 0.0
        %1115 = vmatprep.subr.mxu0 0.0
        %1116 = vmatpush1.msra.mxu0 0.0
        %1117 = vmatprep.mubr.f32.mxu0 0.0
        %1118 = vmatmul.mubr.f32.gmra.mrb[0].mxu0 %v1051
        %v1119 = vpop.f32.mrb[0].mxu0
        %v1120 = vadd.f32 0.0, %v1119
        %v1121 = vpop.f32.mrb[0].mxu0
        %1122 = vdwg.mxu0
        %v1123 = vadd.f32 %v1048, %v1120
        %v1124 = vmax.f32 %v1123, 0.0
        %1125 = vset.pattern.permute.xlu0 5
        %1126 = vperm.xlu0 %1125, %v213
        %v1127 = vpop.permute.xlu0 %1126
        %v1129 = vadd.f32 %v1127, 0.0
        %1131 = vrot.lane.b32.xlu0 %v1124, 16
        %v1132 = vpop.permute.xlu0 %1131
        %v1134 = vsel %vm972, 0.0, %v1132
        %1135 = vrot.lane.b32.xlu0 %v212, 66
        %v1136 = vpop.permute.xlu0 %1135
        %v1137 = vsel %vm566, %v1136, 0
        %1139 = vmatprep.subr.mxu0 0.0
        %1140 = vmatpush1.msra.mxu0 %v1134
        %1141 = vmatprep.subr.mxu0 0.0
        %1142 = vmatpush1.msra.mxu0 0.0
        %1143 = vmatprep.subr.mxu0 0.0
        %1144 = vmatpush1.msra.mxu0 0.0
        %1145 = vmatprep.subr.mxu0 0.0
        %1146 = vmatpush1.msra.mxu0 0.0
        %1147 = vmatprep.subr.mxu0 0.0
        %1148 = vmatpush1.msra.mxu0 0.0
        %1149 = vmatprep.subr.mxu0 0.0
        %1150 = vmatpush1.msra.mxu0 0.0
        %1151 = vmatprep.subr.mxu0 0.0
        %1152 = vmatpush1.msra.mxu0 0.0
        %1153 = vmatprep.subr.mxu0 0.0
        %1154 = vmatpush1.msra.mxu0 0.0
        %1155 = vmatprep.subr.mxu0 0.0
        %1156 = vmatpush1.msra.mxu0 0.0
        %1157 = vmatprep.subr.mxu0 0.0
        %1158 = vmatpush1.msra.mxu0 0.0
        %1159 = vmatprep.subr.mxu0 0.0
        %1160 = vmatpush1.msra.mxu0 0.0
        %1161 = vmatprep.subr.mxu0 0.0
        %1162 = vmatpush1.msra.mxu0 0.0
        %1163 = vmatprep.subr.mxu0 0.0
        %1164 = vmatpush1.msra.mxu0 0.0
        %1165 = vmatprep.subr.mxu0 0.0
        %1166 = vmatpush1.msra.mxu0 0.0
        %1167 = vmatprep.subr.mxu0 0.0
        %1168 = vmatpush1.msra.mxu0 0.0
        %1169 = vmatprep.subr.mxu0 0.0
        %1170 = vmatpush1.msra.mxu0 0.0
        %1171 = vmatprep.subr.mxu0 0.0
        %1172 = vmatpush1.msra.mxu0 0.0
        %1173 = vmatprep.subr.mxu0 0.0
        %1174 = vmatpush1.msra.mxu0 0.0
        %1175 = vmatprep.subr.mxu0 0.0
        %1176 = vmatpush1.msra.mxu0 0.0
        %1177 = vmatprep.subr.mxu0 0.0
        %1178 = vmatpush1.msra.mxu0 0.0
        %1179 = vmatprep.subr.mxu0 0.0
        %1180 = vmatpush1.msra.mxu0 0.0
        %1181 = vmatprep.subr.mxu0 0.0
        %1182 = vmatpush1.msra.mxu0 0.0
        %1183 = vmatprep.subr.mxu0 0.0
        %1184 = vmatpush1.msra.mxu0 0.0
        %1185 = vmatprep.subr.mxu0 0.0
        %1186 = vmatpush1.msra.mxu0 0.0
        %1187 = vmatprep.subr.mxu0 0.0
        %1188 = vmatpush1.msra.mxu0 0.0
        %1189 = vmatprep.subr.mxu0 0.0
        %1190 = vmatpush1.msra.mxu0 0.0
        %1191 = vmatprep.subr.mxu0 0.0
        %1192 = vmatpush1.msra.mxu0 0.0
        %1193 = vmatprep.subr.mxu0 0.0
        %1194 = vmatpush1.msra.mxu0 0.0
        %1195 = vmatprep.subr.mxu0 0.0
        %1196 = vmatpush1.msra.mxu0 0.0
        %1197 = vmatprep.subr.mxu0 0.0
        %1198 = vmatpush1.msra.mxu0 0.0
        %1199 = vmatprep.subr.mxu0 0.0
        %1200 = vmatpush1.msra.mxu0 0.0
        %1201 = vmatprep.subr.mxu0 0.0
        %1202 = vmatpush1.msra.mxu0 0.0
        %1203 = vmatprep.mubr.f32.mxu0 0.0
        %1204 = vmatmul.mubr.f32.gmra.mrb[0].mxu0 %v1137
        %v1205 = vpop.f32.mrb[0].mxu0
        %v1206 = vadd.f32 0.0, %v1205
        %v1207 = vpop.f32.mrb[0].mxu0
        %1208 = vdwg.mxu0
        %v1209 = vadd.f32 %v1129, %v1206
        %1210 = vrot.lane.b32.xlu0 %v212, 58
        %v1211 = vpop.permute.xlu0 %1210
        %v1212 = vsel %vm566, %v1211, 0
        %1214 = vmatprep.subr.mxu0 0.0
        %1215 = vmatpush1.msra.mxu0 %v1124
        %1216 = vmatprep.subr.mxu0 0.0
        %1217 = vmatpush1.msra.mxu0 0.0
        %1218 = vmatprep.subr.mxu0 0.0
        %1219 = vmatpush1.msra.mxu0 0.0
        %1220 = vmatprep.subr.mxu0 0.0
        %1221 = vmatpush1.msra.mxu0 0.0
        %1222 = vmatprep.subr.mxu0 0.0
        %1223 = vmatpush1.msra.mxu0 0.0
        %1224 = vmatprep.subr.mxu0 0.0
        %1225 = vmatpush1.msra.mxu0 0.0
        %1226 = vmatprep.subr.mxu0 0.0
        %1227 = vmatpush1.msra.mxu0 0.0
        %1228 = vmatprep.subr.mxu0 0.0
        %1229 = vmatpush1.msra.mxu0 0.0
        %1230 = vmatprep.subr.mxu0 0.0
        %1231 = vmatpush1.msra.mxu0 0.0
        %1232 = vmatprep.subr.mxu0 0.0
        %1233 = vmatpush1.msra.mxu0 0.0
        %1234 = vmatprep.subr.mxu0 0.0
        %1235 = vmatpush1.msra.mxu0 0.0
        %1236 = vmatprep.subr.mxu0 0.0
        %1237 = vmatpush1.msra.mxu0 0.0
        %1238 = vmatprep.subr.mxu0 0.0
        %1239 = vmatpush1.msra.mxu0 0.0
        %1240 = vmatprep.subr.mxu0 0.0
        %1241 = vmatpush1.msra.mxu0 0.0
        %1242 = vmatprep.subr.mxu0 0.0
        %1243 = vmatpush1.msra.mxu0 0.0
        %1244 = vmatprep.subr.mxu0 0.0
        %1245 = vmatpush1.msra.mxu0 0.0
        %1246 = vmatprep.subr.mxu0 0.0
        %1247 = vmatpush1.msra.mxu0 0.0
        %1248 = vmatprep.subr.mxu0 0.0
        %1249 = vmatpush1.msra.mxu0 0.0
        %1250 = vmatprep.subr.mxu0 0.0
        %1251 = vmatpush1.msra.mxu0 0.0
        %1252 = vmatprep.subr.mxu0 0.0
        %1253 = vmatpush1.msra.mxu0 0.0
        %1254 = vmatprep.subr.mxu0 0.0
        %1255 = vmatpush1.msra.mxu0 0.0
        %1256 = vmatprep.subr.mxu0 0.0
        %1257 = vmatpush1.msra.mxu0 0.0
        %1258 = vmatprep.subr.mxu0 0.0
        %1259 = vmatpush1.msra.mxu0 0.0
        %1260 = vmatprep.subr.mxu0 0.0
        %1261 = vmatpush1.msra.mxu0 0.0
        %1262 = vmatprep.subr.mxu0 0.0
        %1263 = vmatpush1.msra.mxu0 0.0
        %1264 = vmatprep.subr.mxu0 0.0
        %1265 = vmatpush1.msra.mxu0 0.0
        %1266 = vmatprep.subr.mxu0 0.0
        %1267 = vmatpush1.msra.mxu0 0.0
        %1268 = vmatprep.subr.mxu0 0.0
        %1269 = vmatpush1.msra.mxu0 0.0
        %1270 = vmatprep.subr.mxu0 0.0
        %1271 = vmatpush1.msra.mxu0 0.0
        %1272 = vmatprep.subr.mxu0 0.0
        %1273 = vmatpush1.msra.mxu0 0.0
        %1274 = vmatprep.subr.mxu0 0.0
        %1275 = vmatpush1.msra.mxu0 0.0
        %1276 = vmatprep.subr.mxu0 0.0
        %1277 = vmatpush1.msra.mxu0 0.0
        %1278 = vmatprep.mubr.f32.mxu0 0.0
        %1279 = vmatmul.mubr.f32.gmra.mrb[0].mxu0 %v1212
        %v1280 = vpop.f32.mrb[0].mxu0
        %v1281 = vadd.f32 0.0, %v1280
        %v1282 = vpop.f32.mrb[0].mxu0
        %1283 = vdwg.mxu0
        %v1284 = vadd.f32 %v1209, %v1281
        %v1285 = vmax.f32 %v1284, 0.0
        %v1286 = vadd.f32 %v1285, %v960
        %v1287 = vmax.f32 %v1286, 0.0
        %1288 = vset.pattern.permute.xlu0 7
        %1289 = vperm.xlu0 %1288, %v213
        %v1290 = vpop.permute.xlu0 %1289
        %1292 = vrot.lane.b32.xlu0 %v212, 42
        %v1293 = vpop.permute.xlu0 %1292
        %1295 = vrot.lane.b32.xlu0 %v1287, 24
        %v1296 = vpop.permute.xlu0 %1295
        %v1298 = vsel %vm566, %v1293, 0
        %1300 = vmatprep.subr.mxu0 0.0
        %1301 = vmatpush1.msra.mxu0 %v1296
        %1302 = vmatprep.subr.mxu0 0.0
        %1303 = vmatpush1.msra.mxu0 0.0
        %1304 = vmatprep.subr.mxu0 0.0
        %1305 = vmatpush1.msra.mxu0 0.0
        %1306 = vmatprep.subr.mxu0 0.0
        %1307 = vmatpush1.msra.mxu0 0.0
        %1308 = vmatprep.subr.mxu0 0.0
        %1309 = vmatpush1.msra.mxu0 0.0
        %1310 = vmatprep.subr.mxu0 0.0
        %1311 = vmatpush1.msra.mxu0 0.0
        %1312 = vmatprep.subr.mxu0 0.0
        %1313 = vmatpush1.msra.mxu0 0.0
        %1314 = vmatprep.subr.mxu0 0.0
        %1315 = vmatpush1.msra.mxu0 0.0
        %1316 = vmatprep.subr.mxu0 0.0
        %1317 = vmatpush1.msra.mxu0 0.0
        %1318 = vmatprep.subr.mxu0 0.0
        %1319 = vmatpush1.msra.mxu0 0.0
        %1320 = vmatprep.subr.mxu0 0.0
        %1321 = vmatpush1.msra.mxu0 0.0
        %1322 = vmatprep.subr.mxu0 0.0
        %1323 = vmatpush1.msra.mxu0 0.0
        %1324 = vmatprep.subr.mxu0 0.0
        %1325 = vmatpush1.msra.mxu0 0.0
        %1326 = vmatprep.subr.mxu0 0.0
        %1327 = vmatpush1.msra.mxu0 0.0
        %1328 = vmatprep.subr.mxu0 0.0
        %1329 = vmatpush1.msra.mxu0 0.0
        %1330 = vmatprep.subr.mxu0 0.0
        %1331 = vmatpush1.msra.mxu0 0.0
        %1332 = vmatprep.subr.mxu0 0.0
        %1333 = vmatpush1.msra.mxu0 0.0
        %1334 = vmatprep.subr.mxu0 0.0
        %1335 = vmatpush1.msra.mxu0 0.0
        %1336 = vmatprep.subr.mxu0 0.0
        %1337 = vmatpush1.msra.mxu0 0.0
        %1338 = vmatprep.subr.mxu0 0.0
        %1339 = vmatpush1.msra.mxu0 0.0
        %1340 = vmatprep.subr.mxu0 0.0
        %1341 = vmatpush1.msra.mxu0 0.0
        %1342 = vmatprep.subr.mxu0 0.0
        %1343 = vmatpush1.msra.mxu0 0.0
        %1344 = vmatprep.subr.mxu0 0.0
        %1345 = vmatpush1.msra.mxu0 0.0
        %1346 = vmatprep.subr.mxu0 0.0
        %1347 = vmatpush1.msra.mxu0 0.0
        %1348 = vmatprep.subr.mxu0 0.0
        %1349 = vmatpush1.msra.mxu0 0.0
        %1350 = vmatprep.subr.mxu0 0.0
        %1351 = vmatpush1.msra.mxu0 0.0
        %1352 = vmatprep.subr.mxu0 0.0
        %1353 = vmatpush1.msra.mxu0 0.0
        %1354 = vmatprep.subr.mxu0 0.0
        %1355 = vmatpush1.msra.mxu0 0.0
        %1356 = vmatprep.subr.mxu0 0.0
        %1357 = vmatpush1.msra.mxu0 0.0
        %1358 = vmatprep.subr.mxu0 0.0
        %1359 = vmatpush1.msra.mxu0 0.0
        %1360 = vmatprep.subr.mxu0 0.0
        %1361 = vmatpush1.msra.mxu0 0.0
        %1362 = vmatprep.subr.mxu0 0.0
        %1363 = vmatpush1.msra.mxu0 0.0
        %1364 = vmatprep.mubr.f32.mxu0 0.0
        %1365 = vmatmul.mubr.f32.gmra.mrb[0].mxu0 %v1298
        %v1366 = vpop.f32.mrb[0].mxu0
        %v1367 = vadd.f32 %v1290, %v1366
        %v1368 = vpop.f32.mrb[0].mxu0
        %1369 = vdwg.mxu0
        %vm1370 = vcmask 61440
        %v1371 = vsel %vm1370, %v1367, -inf
        %v1372 = vrot.slane %v1371, 4
        %v1373 = vmax.f32 %v1371, %v1372
        %v1374 = vrot.slane %v1373, 2
        %v1375 = vmax.f32 %v1373, %v1374
        %v1376 = vrot.slane %v1375, 1
        %v1377 = vmax.f32 %v1375, %v1376
        %v1378 = vsub.f32 %v1367, %v1377
        %v1379 = vmul.f32 %v1378, 1.442695
        %v1380 = vpow.pop %v1379
        %v1381 = vsel %vm1370, %v1380, 0.0
        %v1382 = vrot.slane %v1381, 4
        %v1383 = vadd.f32 %v1381, %v1382
        %v1384 = vrot.slane %v1383, 2
        %v1385 = vadd.f32 %v1383, %v1384
        %v1386 = vrot.slane %v1385, 1
        %v1387 = vadd.f32 %v1385, %v1386
        %v1388 = vlog2.pop %v1387
        %v1389 = vmul.f32 %v1388, 0.6931472
        %v1390 = vsub.f32 %v1378, %v1389
        %1391 = vst.msk [vmem:[%s210] sm:$0x1f] %vm1370, %v1390
        %p1392 = scmp.lt.s32.totalorder %s18, 1
        %s1393 = scalar_select %p1392, %s18, 1
        %s1394 = smul.addr %s1393, 8
        %s1395 = scalar_lea.vmem %s3, %s1394
        // Predicated region
        $region45: #{tpu_custom_call.1} parent=31 // pred_check
          %p1396 = pneg %p104
        $region46: #{tpu_custom_call.1} parent=31 // pred_check_branch
          %1398 = sbr.rel (%p1396) target = $region48
        $region47: #{tpu_custom_call.1} parent=31 // pred_region
          _
        $region48: #{tpu_custom_call.1} parent=31 // pred_fallthru
          _
      $region32: #{tpu_custom_call.1} parent=5 // pred_fallthru
        _
      %p1399 = scmp.le.s32.totalorder 2, %s13
      // Predicated region
      $region49: #{tpu_custom_call.1} parent=5 // pred_check
        %p1400 = pneg %p1399
      $region50: #{tpu_custom_call.1} parent=5 // pred_check_branch
        %1402 = sbr.rel (%p1400) target = $region52
      $region51: #{tpu_custom_call.1} parent=5 // pred_region
        %s1403 = ssub.s32 %s13, 2
        // Predicated region
        $region53: #{tpu_custom_call.1} parent=51 // pred_check
          %p1404 = pneg %p110
        $region54: #{tpu_custom_call.1} parent=51 // pred_check_branch
          %1406 = sbr.rel (%p1404) target = $region56
        $region55: #{tpu_custom_call.1} parent=51 // pred_region
          %p1407 = scmp.lt.s32.totalorder %s19, 1
          %s1408 = scalar_select %p1407, %s19, 1
          %s1409 = smul.addr %s1408, 8
          %s1410 = scalar_lea.vmem %s3, %s1409
        $region56: #{tpu_custom_call.1} parent=51 // pred_fallthru
          _
      $region52: #{tpu_custom_call.1} parent=5 // pred_fallthru
        _
    $region6: #{tpu_custom_call.1} parent=1 // loop_footer
      %s17 = sadd.s32 1, %s13
    $region7: #{tpu_custom_call.1} parent=1 // loop_footer_branch
      %12 = sbr.rel target = $region3
    $region8: #{tpu_custom_call.1} parent=1 // loop_exit
      _
    %1411 = vsyncpa [#allocation3], 1
    %s1412 = scalar_lea.sflag [#allocation3], 1
    %1413 = vsyncpa %s1412, 1
    %1414 = vsyncpa [#allocation5], 1

</llo_original>
